<compile_context>
chip_gen: v6e
topology: v6e:2x2x1
jax: 0.10.0
libtpu: 0.0.40
codegen_flags: <defaults>
</compile_context>

<pallas_src>
import functools
import math

import jax
import jax.numpy as jnp
from jax import lax
from jax.experimental import pallas as pl
from jax.experimental.pallas import tpu as pltpu


# ------------------------------ tiling helpers -------------------------------


def _round_up(x, m):
    return ((x + m - 1) // m) * m


@functools.lru_cache(maxsize=None)
def _vmem_limit_bytes():
    """Per-generation scoped-VMEM budget (~3/4 of physical, capped)."""
    default = 64 * 1024 * 1024
    try:
        info = pltpu.get_tpu_info()
        cap = getattr(info, "vmem_capacity_bytes", None)
        if not cap:
            return default
        return int(min(cap * 3 // 4, 112 * 1024 * 1024))
    except Exception:
        return default


def _choose_row_tile(m, target=512):
    """Row tile (multiple of 8). Returns (tm, padded_m); pads instead of
    falling back to one monolithic block."""
    if m % 8 == 0:
        for tm in range(min(target, m), 0, -8):
            if tm % 8 == 0 and m % tm == 0:
                return tm, m
    tm = min(target, _round_up(m, 8))
    return tm, _round_up(m, tm)


def _choose_col_tile(n, target=512):
    """Output-column tile: multiple of 128 (MXU / lane native) or the full dim."""
    if n <= 256:
        return n
    for tn in (512, 384, 256, 128):
        if tn <= target and n % tn == 0:
            return tn
    return n


def _choose_k_tile(k):
    """Contraction tile: full dim for moderate sizes, else a 128-multiple divisor."""
    if k <= 2048:
        return k
    for tk in (1024, 512, 256, 128):
        if k % tk == 0:
            return tk
    return k


def _choose_q_block(length, target=256):
    """q-row block for the retention grid (divisor of L)."""
    if length <= target:
        return length
    for qb in range(target, 0, -8):
        if qb % 8 == 0 and length % qb == 0:
            return qb
    return length


# ----------------------------- Pallas kernels --------------------------------


def _qkv_kernel(x_ref, wq_ref, wk_ref, wv_ref, bq_ref, bk_ref, bv_ref,
                q_out, k_out, v_out, q_acc, k_acc, v_acc):
    # One row/column tile of the three projections. x is read once per grid
    # point and multiplied against the three (tk, tn) weight tiles; fp32 VMEM
    # accumulators carry the contraction axis; the final store casts to the
    # output dtype (bf16 in the throughput path -> half the HBM intermediate).
    kstep = pl.program_id(2)

    @pl.when(kstep == 0)
    def _():
        q_acc[...] = jnp.zeros_like(q_acc)
        k_acc[...] = jnp.zeros_like(k_acc)
        v_acc[...] = jnp.zeros_like(v_acc)

    x = x_ref[...]
    q_acc[...] += jnp.dot(x, wq_ref[...], preferred_element_type=jnp.float32)
    k_acc[...] += jnp.dot(x, wk_ref[...], preferred_element_type=jnp.float32)
    v_acc[...] += jnp.dot(x, wv_ref[...], preferred_element_type=jnp.float32)

    @pl.when(kstep == pl.num_programs(2) - 1)
    def _():
        q_out[...] = (q_acc[...] + bq_ref[...]).astype(q_out.dtype)
        k_out[...] = (k_acc[...] + bk_ref[...]).astype(k_out.dtype)
        v_out[...] = (v_acc[...] + bv_ref[...]).astype(v_out.dtype)


def fused_qkv(x2d, wq_t, wk_t, wv_t, bq, bk, bv, *, out_dtype, vmem_limit):
    """q, k, v = x2d @ w*_t + b*  with w*_t in (D_in, D_out) layout."""
    m, d_in = x2d.shape
    d_out = wq_t.shape[1]
    tm, m_pad = _choose_row_tile(m)
    if m_pad != m:
        x2d = jnp.pad(x2d, ((0, m_pad - m), (0, 0)))
    tn = _choose_col_tile(d_out)
    tk = _choose_k_tile(d_in)
    grid = (m_pad // tm, d_out // tn, d_in // tk)

    w_spec = pl.BlockSpec((tk, tn), lambda i, j, kk: (kk, j))
    b_spec = pl.BlockSpec((1, tn), lambda i, j, kk: (0, j))
    o_spec = pl.BlockSpec((tm, tn), lambda i, j, kk: (i, j))

    outs = pl.pallas_call(
        _qkv_kernel,
        out_shape=tuple(jax.ShapeDtypeStruct((m_pad, d_out), out_dtype)
                        for _ in range(3)),
        grid=grid,
        in_specs=[
            pl.BlockSpec((tm, tk), lambda i, j, kk: (i, kk)),
            w_spec, w_spec, w_spec,
            b_spec, b_spec, b_spec,
        ],
        out_specs=(o_spec, o_spec, o_spec),
        scratch_shapes=[pltpu.VMEM((tm, tn), jnp.float32) for _ in range(3)],
        compiler_params=pltpu.CompilerParams(
            dimension_semantics=("parallel", "parallel", "arbitrary"),
            vmem_limit_bytes=vmem_limit,
        ),
    )(x2d, wq_t, wk_t, wv_t, bq, bk, bv)

    if m_pad != m:
        outs = tuple(o[:m] for o in outs)
    return outs


def _retention_oproj_kernel(q_ref, k_ref, v_ref, decay_ref, wo_ref, bo_ref,
                            o_ref, *, num_heads, head_dim, compute_dtype):
    # One q-row block of one batch. q: (q_blk, D); k/v: (L, D); decay: (q_blk, D)
    # with decay[l, h*Dh+d] = gamma[h] ** l; wo: (D, D) (resident, constant
    # index_map); output: the FINAL projected (q_blk, D) tile, stored once.
    qblk, D = q_ref.shape
    L = k_ref.shape[0]
    qi = pl.program_id(1)

    # Fold the per-query-row decay into q (fp32 VPU), cast once for the MXU.
    q = (q_ref[...].astype(jnp.float32) * decay_ref[...]).astype(compute_dtype)
    k = k_ref[...]
    v = v_ref[...]
    wo = wo_ref[...]

    # Causal mask for this q block, built once and reused for every head.
    row = qi * qblk + lax.broadcasted_iota(jnp.int32, (qblk, L), 0)
    col = lax.broadcasted_iota(jnp.int32, (qblk, L), 1)
    causal = row >= col

    dn = (((1,), (1,)), ((), ()))  # contract last dims: q @ k.T, no transpose
    acc = jnp.zeros((qblk, D), jnp.float32)
    for h in range(num_heads):
        sl = slice(h * head_dim, (h + 1) * head_dim)
        s = lax.dot_general(q[:, sl], k[:, sl], dn,
                            preferred_element_type=jnp.float32)       # (q_blk, L)
        # Mask in compute dtype (bf16 halves the L^2 pass on bf16-VPU chips;
        # masked entries are exactly zero either way).
        s = jnp.where(causal, s.astype(compute_dtype), jnp.zeros((), compute_dtype))
        pv = jnp.dot(s, v[:, sl], preferred_element_type=jnp.float32)  # (q_blk, Dh)
        # Fused output projection: sum_h pv_h @ Wo_t[h*Dh:(h+1)*Dh, :].
        acc = acc + jnp.dot(pv.astype(compute_dtype), wo[sl, :],
                            preferred_element_type=jnp.float32)
    # Single lane-dense store of the projected block (no per-head narrow stores).
    o_ref[...] = (acc + bo_ref[...]).astype(o_ref.dtype)


def retention_oproj(q, k, v, decay, wo_t, bo, num_heads, head_dim, *,
                    compute_dtype, vmem_limit):
    """Retention core + fused output projection. q/k/v: (B, L, D) -> (B, L, D)."""
    B, L, D = q.shape
    qblk = _choose_q_block(L)
    kernel = functools.partial(
        _retention_oproj_kernel,
        num_heads=num_heads, head_dim=head_dim, compute_dtype=compute_dtype)
    return pl.pallas_call(
        kernel,
        out_shape=jax.ShapeDtypeStruct((B, L, D), jnp.float32),
        grid=(B, L // qblk),
        in_specs=[
            pl.BlockSpec((None, qblk, D), lambda b, qi: (b, qi, 0)),  # q block
            pl.BlockSpec((None, L, D), lambda b, qi: (b, 0, 0)),      # full K
            pl.BlockSpec((None, L, D), lambda b, qi: (b, 0, 0)),      # full V
            pl.BlockSpec((qblk, D), lambda b, qi: (qi, 0)),           # decay rows
            pl.BlockSpec((D, D), lambda b, qi: (0, 0)),               # Wo (resident)
            pl.BlockSpec((1, D), lambda b, qi: (0, 0)),               # bo
        ],
        out_specs=pl.BlockSpec((None, qblk, D), lambda b, qi: (b, qi, 0)),
        compiler_params=pltpu.CompilerParams(
            dimension_semantics=("parallel", "parallel"),
            vmem_limit_bytes=vmem_limit,
        ),
    )(q, k, v, decay, wo_t, bo)


# ------------------------------ module wrapper --------------------------------


def retentive_attention(x, params, *, compute_dtype=jnp.float32):
    B, L, D = x.shape
    gamma = params["gamma"].astype(jnp.float32)
    H = gamma.shape[0]
    Dh = D // H
    vmem = _vmem_limit_bytes()

    # One-time weight prep: pre-transpose to (D_in, D_out) so kernels contract
    # last(x) with first(w) directly on the MXU; cast MXU operands once.
    wq_t = params["wq"].T.astype(compute_dtype)
    wk_t = params["wk"].T.astype(compute_dtype)
    wv_t = params["wv"].T.astype(compute_dtype)
    wo_t = params["wo"].T.astype(compute_dtype)
    bq = params["bq"].reshape(1, D).astype(jnp.float32)
    bk = params["bk"].reshape(1, D).astype(jnp.float32)
    bv = params["bv"].reshape(1, D).astype(jnp.float32)
    bo = params["bo"].reshape(1, D).astype(jnp.float32)

    # Fused QKV projection: x streamed once; q/k/v emitted as separate arrays
    # in compute_dtype (bf16 halves the HBM bytes of the largest intermediates).
    x2 = x.reshape(B * L, D).astype(compute_dtype)
    q2, k2, v2 = fused_qkv(x2, wq_t, wk_t, wv_t, bq, bk, bv,
                           out_dtype=compute_dtype, vmem_limit=vmem)
    q = q2.reshape(B, L, D)
    k = k2.reshape(B, L, D)
    v = v2.reshape(B, L, D)

    # decay[l, h*Dh + d] = gamma[h] ** l  (query-row decay, as in the module).
    pos = jnp.arange(L, dtype=jnp.float32)
    decay = jnp.repeat((gamma[:, None] ** pos[None, :]).T, Dh, axis=1)   # (L, D)

    # Retention core with the output projection fused in (single HBM write of
    # the final (B, L, D) result; no attn round-trip, no third kernel launch).
    return retention_oproj(q, k, v, decay, wo_t, bo, H, Dh,
                           compute_dtype=compute_dtype, vmem_limit=vmem)


# ------------------------------ pure-JAX reference ----------------------------


def reference(x, params):
    B, L, D = x.shape
    gamma = params["gamma"]
    H = gamma.shape[0]
    Dh = D // H
    hp = lax.Precision.HIGHEST

    def lin(t, w, b):
        return jnp.einsum("bld,ed->ble", t, w, precision=hp) + b

    q = lin(x, params["wq"], params["bq"]).reshape(B, L, H, Dh).transpose(0, 2, 1, 3)
    k = lin(x, params["wk"], params["bk"]).reshape(B, L, H, Dh).transpose(0, 2, 1, 3)
    v = lin(x, params["wv"], params["bv"]).reshape(B, L, H, Dh).transpose(0, 2, 1, 3)

    decay = gamma[None, :, None, None] ** jnp.arange(L, dtype=jnp.float32)[None, None, :, None]
    w = jnp.einsum("bhld,bhmd->bhlm", q, k, precision=hp)
    mask = jnp.tril(jnp.ones((L, L), jnp.float32))
    w = w * mask[None, None] * decay
    out = jnp.einsum("bhlm,bhmd->bhld", w, v, precision=hp)
    out = out.transpose(0, 2, 1, 3).reshape(B, L, D)
    return lin(out, params["wo"], params["bo"])


# ---------------------------------- main ---------------------------------------

if __name__ == "__main__":
    B, L, D, H = 2, 8, 32, 4  # d_model=32, num_heads=4 -> head_dim=8

    key = jax.random.PRNGKey(0)
    keys = jax.random.split(key, 9)
    scale = 1.0 / math.sqrt(D)

    params = {
        "wq": scale * jax.random.normal(keys[0], (D, D), jnp.float32),
        "bq": scale * jax.random.normal(keys[1], (D,), jnp.float32),
        "wk": scale * jax.random.normal(keys[2], (D, D), jnp.float32),
        "bk": scale * jax.random.normal(keys[3], (D,), jnp.float32),
        "wv": scale * jax.random.normal(keys[4], (D, D), jnp.float32),
        "bv": scale * jax.random.normal(keys[5], (D,), jnp.float32),
        "wo": scale * jax.random.normal(keys[6], (D, D), jnp.float32),
        "bo": scale * jax.random.normal(keys[7], (D,), jnp.float32),
        # RetNet-style per-head decay in (0, 1); deterministic.
        "gamma": 1.0 - 2.0 ** (-5.0 - jnp.arange(H, dtype=jnp.float32)),
    }

    x = jax.random.normal(keys[8], (B, L, D), jnp.float32)

    ref = reference(x, params)

    # fp32 MXU path: correctness gate against the high-precision reference.
    fwd_f32 = jax.jit(functools.partial(retentive_attention, compute_dtype=jnp.float32))
    out_f32 = jax.block_until_ready(fwd_f32(x, params))
    assert out_f32.shape == (B, L, D)
    assert jnp.allclose(out_f32, ref, atol=1e-3, rtol=1e-3), "fp32 Pallas result mismatch"

    # bf16 MXU path (fp32 accumulation, bf16 activations/intermediates): the
    # throughput configuration; checked with a bf16-appropriate tolerance.
    fwd_bf16 = jax.jit(functools.partial(retentive_attention, compute_dtype=jnp.bfloat16))
    out_bf16 = jax.block_until_ready(fwd_bf16(x, params))
    assert out_bf16.shape == (B, L, D)
    assert jnp.allclose(out_bf16, ref, atol=5e-1, rtol=5e-2), "bf16 Pallas result mismatch"

    print("KERNEL_OK")
</pallas_src>

<mosaic_0001>
module attributes {stable_mosaic.version = 11 : i64} {
  func.func @_qkv_kernel(%arg0: i32, %arg1: i32, %arg2: i32, %arg3: memref<16x32xf32, #tpu.memory_space<vmem>>, %arg4: memref<32x32xf32, #tpu.memory_space<vmem>>, %arg5: memref<32x32xf32, #tpu.memory_space<vmem>>, %arg6: memref<32x32xf32, #tpu.memory_space<vmem>>, %arg7: memref<1x32xf32, #tpu.memory_space<vmem>>, %arg8: memref<1x32xf32, #tpu.memory_space<vmem>>, %arg9: memref<1x32xf32, #tpu.memory_space<vmem>>, %arg10: memref<16x32xf32, #tpu.memory_space<vmem>>, %arg11: memref<16x32xf32, #tpu.memory_space<vmem>>, %arg12: memref<16x32xf32, #tpu.memory_space<vmem>>, %arg13: memref<16x32xf32, #tpu.memory_space<vmem>>, %arg14: memref<16x32xf32, #tpu.memory_space<vmem>>, %arg15: memref<16x32xf32, #tpu.memory_space<vmem>>) attributes {dimension_semantics = [#tpu.dimension_semantics<parallel>, #tpu.dimension_semantics<parallel>, #tpu.dimension_semantics<arbitrary>], iteration_bounds = array<i64: 1, 1, 1>, scalar_prefetch = 0 : i64, scratch_operands = 3 : i64, tpu.core_type = #tpu.core_type<tc>, window_params = [{transform_indices = @transform_0, window_bounds = array<i64: 16, 32>}, {transform_indices = @transform_1, window_bounds = array<i64: 32, 32>}, {transform_indices = @transform_2, window_bounds = array<i64: 32, 32>}, {transform_indices = @transform_3, window_bounds = array<i64: 32, 32>}, {transform_indices = @transform_4, window_bounds = array<i64: 1, 32>}, {transform_indices = @transform_5, window_bounds = array<i64: 1, 32>}, {transform_indices = @transform_6, window_bounds = array<i64: 1, 32>}, {transform_indices = @transform_7, window_bounds = array<i64: 16, 32>}, {transform_indices = @transform_8, window_bounds = array<i64: 16, 32>}, {transform_indices = @transform_9, window_bounds = array<i64: 16, 32>}]} {
    %c0_i32 = arith.constant 0 : i32
    %0 = arith.cmpi eq, %arg2, %c0_i32 : i32
    %1 = arith.extui %0 : i1 to i32
    %c0_i32_0 = arith.constant 0 : i32
    %2 = arith.cmpi ne, %1, %c0_i32_0 : i32
    scf.if %2 {
      %cst_24 = arith.constant 0.000000e+00 : f32
      %22 = vector.broadcast %cst_24 : f32 to vector<16x32xf32>
      %c0_25 = arith.constant 0 : index
      %c0_26 = arith.constant 0 : index
      %23 = vector.load %arg13[%c0_25, %c0_26] : memref<16x32xf32, #tpu.memory_space<vmem>>, vector<16x32xf32>
      tpu.vector_store %arg13[%c0_25, %c0_26], %22 {strides = array<i32>} : memref<16x32xf32, #tpu.memory_space<vmem>>, vector<16x32xf32>,
      %cst_27 = arith.constant 0.000000e+00 : f32
      %24 = vector.broadcast %cst_27 : f32 to vector<16x32xf32>
      %c0_28 = arith.constant 0 : index
      %c0_29 = arith.constant 0 : index
      %25 = vector.load %arg14[%c0_28, %c0_29] : memref<16x32xf32, #tpu.memory_space<vmem>>, vector<16x32xf32>
      tpu.vector_store %arg14[%c0_28, %c0_29], %24 {strides = array<i32>} : memref<16x32xf32, #tpu.memory_space<vmem>>, vector<16x32xf32>,
      %cst_30 = arith.constant 0.000000e+00 : f32
      %26 = vector.broadcast %cst_30 : f32 to vector<16x32xf32>
      %c0_31 = arith.constant 0 : index
      %c0_32 = arith.constant 0 : index
      %27 = vector.load %arg15[%c0_31, %c0_32] : memref<16x32xf32, #tpu.memory_space<vmem>>, vector<16x32xf32>
      tpu.vector_store %arg15[%c0_31, %c0_32], %26 {strides = array<i32>} : memref<16x32xf32, #tpu.memory_space<vmem>>, vector<16x32xf32>,
    } else {
    }
    %c0 = arith.constant 0 : index
    %c0_1 = arith.constant 0 : index
    %3 = vector.load %arg3[%c0, %c0_1] : memref<16x32xf32, #tpu.memory_space<vmem>>, vector<16x32xf32>
    %c0_2 = arith.constant 0 : index
    %c0_3 = arith.constant 0 : index
    %4 = vector.load %arg13[%c0_2, %c0_3] : memref<16x32xf32, #tpu.memory_space<vmem>>, vector<16x32xf32>
    %c0_4 = arith.constant 0 : index
    %c0_5 = arith.constant 0 : index
    %5 = vector.load %arg4[%c0_4, %c0_5] : memref<32x32xf32, #tpu.memory_space<vmem>>, vector<32x32xf32>
    %cst = arith.constant dense<0.000000e+00> : vector<16x32xf32>
    %6 = tpu.matmul %3, %5, %cst {dimension_numbers = #tpu.dot_dimension_numbers<[1], [0], [0], [1], [0, 0, 1, 1], [], []>} : vector<16x32xf32>, vector<32x32xf32>, vector<16x32xf32> -> vector<16x32xf32>
    %7 = arith.addf %4, %6 : vector<16x32xf32>
    %c0_6 = arith.constant 0 : index
    %c0_7 = arith.constant 0 : index
    %8 = vector.load %arg13[%c0_6, %c0_7] : memref<16x32xf32, #tpu.memory_space<vmem>>, vector<16x32xf32>
    tpu.vector_store %arg13[%c0_6, %c0_7], %7 {strides = array<i32>} : memref<16x32xf32, #tpu.memory_space<vmem>>, vector<16x32xf32>,
    %c0_8 = arith.constant 0 : index
    %c0_9 = arith.constant 0 : index
    %9 = vector.load %arg14[%c0_8, %c0_9] : memref<16x32xf32, #tpu.memory_space<vmem>>, vector<16x32xf32>
    %c0_10 = arith.constant 0 : index
    %c0_11 = arith.constant 0 : index
    %10 = vector.load %arg5[%c0_10, %c0_11] : memref<32x32xf32, #tpu.memory_space<vmem>>, vector<32x32xf32>
    %cst_12 = arith.constant dense<0.000000e+00> : vector<16x32xf32>
    %11 = tpu.matmul %3, %10, %cst_12 {dimension_numbers = #tpu.dot_dimension_numbers<[1], [0], [0], [1], [0, 0, 1, 1], [], []>} : vector<16x32xf32>, vector<32x32xf32>, vector<16x32xf32> -> vector<16x32xf32>
    %12 = arith.addf %9, %11 : vector<16x32xf32>
    %c0_13 = arith.constant 0 : index
    %c0_14 = arith.constant 0 : index
    %13 = vector.load %arg14[%c0_13, %c0_14] : memref<16x32xf32, #tpu.memory_space<vmem>>, vector<16x32xf32>
    tpu.vector_store %arg14[%c0_13, %c0_14], %12 {strides = array<i32>} : memref<16x32xf32, #tpu.memory_space<vmem>>, vector<16x32xf32>,
    %c0_15 = arith.constant 0 : index
    %c0_16 = arith.constant 0 : index
    %14 = vector.load %arg15[%c0_15, %c0_16] : memref<16x32xf32, #tpu.memory_space<vmem>>, vector<16x32xf32>
    %c0_17 = arith.constant 0 : index
    %c0_18 = arith.constant 0 : index
    %15 = vector.load %arg6[%c0_17, %c0_18] : memref<32x32xf32, #tpu.memory_space<vmem>>, vector<32x32xf32>
    %cst_19 = arith.constant dense<0.000000e+00> : vector<16x32xf32>
    %16 = tpu.matmul %3, %15, %cst_19 {dimension_numbers = #tpu.dot_dimension_numbers<[1], [0], [0], [1], [0, 0, 1, 1], [], []>} : vector<16x32xf32>, vector<32x32xf32>, vector<16x32xf32> -> vector<16x32xf32>
    %17 = arith.addf %14, %16 : vector<16x32xf32>
    %c0_20 = arith.constant 0 : index
    %c0_21 = arith.constant 0 : index
    %18 = vector.load %arg15[%c0_20, %c0_21] : memref<16x32xf32, #tpu.memory_space<vmem>>, vector<16x32xf32>
    tpu.vector_store %arg15[%c0_20, %c0_21], %17 {strides = array<i32>} : memref<16x32xf32, #tpu.memory_space<vmem>>, vector<16x32xf32>,
    %c0_i32_22 = arith.constant 0 : i32
    %19 = arith.cmpi eq, %arg2, %c0_i32_22 : i32
    %20 = arith.extui %19 : i1 to i32
    %c0_i32_23 = arith.constant 0 : i32
    %21 = arith.cmpi ne, %20, %c0_i32_23 : i32
    scf.if %21 {
      %c0_24 = arith.constant 0 : index
      %c0_25 = arith.constant 0 : index
      %22 = vector.load %arg13[%c0_24, %c0_25] : memref<16x32xf32, #tpu.memory_space<vmem>>, vector<16x32xf32>
      %c0_26 = arith.constant 0 : index
      %c0_27 = arith.constant 0 : index
      %23 = vector.load %arg7[%c0_26, %c0_27] : memref<1x32xf32, #tpu.memory_space<vmem>>, vector<1x32xf32>
      %24 = vector.broadcast %23 : vector<1x32xf32> to vector<16x32xf32>
      %25 = arith.addf %22, %24 : vector<16x32xf32>
      %c0_28 = arith.constant 0 : index
      %c0_29 = arith.constant 0 : index
      %26 = vector.load %arg10[%c0_28, %c0_29] : memref<16x32xf32, #tpu.memory_space<vmem>>, vector<16x32xf32>
      tpu.vector_store %arg10[%c0_28, %c0_29], %25 {strides = array<i32>} : memref<16x32xf32, #tpu.memory_space<vmem>>, vector<16x32xf32>,
      %c0_30 = arith.constant 0 : index
      %c0_31 = arith.constant 0 : index
      %27 = vector.load %arg14[%c0_30, %c0_31] : memref<16x32xf32, #tpu.memory_space<vmem>>, vector<16x32xf32>
      %c0_32 = arith.constant 0 : index
      %c0_33 = arith.constant 0 : index
      %28 = vector.load %arg8[%c0_32, %c0_33] : memref<1x32xf32, #tpu.memory_space<vmem>>, vector<1x32xf32>
      %29 = vector.broadcast %28 : vector<1x32xf32> to vector<16x32xf32>
      %30 = arith.addf %27, %29 : vector<16x32xf32>
      %c0_34 = arith.constant 0 : index
      %c0_35 = arith.constant 0 : index
      %31 = vector.load %arg11[%c0_34, %c0_35] : memref<16x32xf32, #tpu.memory_space<vmem>>, vector<16x32xf32>
      tpu.vector_store %arg11[%c0_34, %c0_35], %30 {strides = array<i32>} : memref<16x32xf32, #tpu.memory_space<vmem>>, vector<16x32xf32>,
      %c0_36 = arith.constant 0 : index
      %c0_37 = arith.constant 0 : index
      %32 = vector.load %arg15[%c0_36, %c0_37] : memref<16x32xf32, #tpu.memory_space<vmem>>, vector<16x32xf32>
      %c0_38 = arith.constant 0 : index
      %c0_39 = arith.constant 0 : index
      %33 = vector.load %arg9[%c0_38, %c0_39] : memref<1x32xf32, #tpu.memory_space<vmem>>, vector<1x32xf32>
      %34 = vector.broadcast %33 : vector<1x32xf32> to vector<16x32xf32>
      %35 = arith.addf %32, %34 : vector<16x32xf32>
      %c0_40 = arith.constant 0 : index
      %c0_41 = arith.constant 0 : index
      %36 = vector.load %arg12[%c0_40, %c0_41] : memref<16x32xf32, #tpu.memory_space<vmem>>, vector<16x32xf32>
      tpu.vector_store %arg12[%c0_40, %c0_41], %35 {strides = array<i32>} : memref<16x32xf32, #tpu.memory_space<vmem>>, vector<16x32xf32>,
    } else {
    }
    return
  }
  func.func @transform_0(%arg0: i32, %arg1: i32, %arg2: i32) -> (i32, i32) {
    %c0_i32 = arith.constant 0 : i32
    return %arg0, %arg2 : i32, i32
  }
  func.func @transform_1(%arg0: i32, %arg1: i32, %arg2: i32) -> (i32, i32) {
    %c0_i32 = arith.constant 0 : i32
    return %arg2, %arg1 : i32, i32
  }
  func.func @transform_2(%arg0: i32, %arg1: i32, %arg2: i32) -> (i32, i32) {
    %c0_i32 = arith.constant 0 : i32
    return %arg2, %arg1 : i32, i32
  }
  func.func @transform_3(%arg0: i32, %arg1: i32, %arg2: i32) -> (i32, i32) {
    %c0_i32 = arith.constant 0 : i32
    return %arg2, %arg1 : i32, i32
  }
  func.func @transform_4(%arg0: i32, %arg1: i32, %arg2: i32) -> (i32, i32) {
    %c0_i32 = arith.constant 0 : i32
    %c0_i32_0 = arith.constant 0 : i32
    return %c0_i32, %arg1 : i32, i32
  }
  func.func @transform_5(%arg0: i32, %arg1: i32, %arg2: i32) -> (i32, i32) {
    %c0_i32 = arith.constant 0 : i32
    %c0_i32_0 = arith.constant 0 : i32
    return %c0_i32, %arg1 : i32, i32
  }
  func.func @transform_6(%arg0: i32, %arg1: i32, %arg2: i32) -> (i32, i32) {
    %c0_i32 = arith.constant 0 : i32
    %c0_i32_0 = arith.constant 0 : i32
    return %c0_i32, %arg1 : i32, i32
  }
  func.func @transform_7(%arg0: i32, %arg1: i32, %arg2: i32) -> (i32, i32) {
    %c0_i32 = arith.constant 0 : i32
    return %arg0, %arg1 : i32, i32
  }
  func.func @transform_8(%arg0: i32, %arg1: i32, %arg2: i32) -> (i32, i32) {
    %c0_i32 = arith.constant 0 : i32
    return %arg0, %arg1 : i32, i32
  }
  func.func @transform_9(%arg0: i32, %arg1: i32, %arg2: i32) -> (i32, i32) {
    %c0_i32 = arith.constant 0 : i32
    return %arg0, %arg1 : i32, i32
  }
}

module attributes {stable_mosaic.version = 11 : i64} {
  func.func @_retention_oproj_kernel(%arg0: i32, %arg1: i32, %arg2: memref<1x8x32xf32, #tpu.memory_space<vmem>>, %arg3: memref<1x8x32xf32, #tpu.memory_space<vmem>>, %arg4: memref<1x8x32xf32, #tpu.memory_space<vmem>>, %arg5: memref<8x32xf32, #tpu.memory_space<vmem>>, %arg6: memref<32x32xf32, #tpu.memory_space<vmem>>, %arg7: memref<1x32xf32, #tpu.memory_space<vmem>>, %arg8: memref<1x8x32xf32, #tpu.memory_space<vmem>>) attributes {dimension_semantics = [#tpu.dimension_semantics<parallel>, #tpu.dimension_semantics<parallel>], iteration_bounds = array<i64: 2, 1>, scalar_prefetch = 0 : i64, scratch_operands = 0 : i64, tpu.core_type = #tpu.core_type<tc>, window_params = [{transform_indices = @transform_0, window_bounds = array<i64: 1, 8, 32>}, {transform_indices = @transform_1, window_bounds = array<i64: 1, 8, 32>}, {transform_indices = @transform_2, window_bounds = array<i64: 1, 8, 32>}, {transform_indices = @transform_3, window_bounds = array<i64: 8, 32>}, {pipeline_mode = #tpu.pipeline_mode<synchronous>, transform_indices = @transform_4, window_bounds = array<i64: 32, 32>}, {pipeline_mode = #tpu.pipeline_mode<synchronous>, transform_indices = @transform_5, window_bounds = array<i64: 1, 32>}, {transform_indices = @transform_6, window_bounds = array<i64: 1, 8, 32>}]} {
    %c0 = arith.constant 0 : index
    %c0_0 = arith.constant 0 : index
    %c0_1 = arith.constant 0 : index
    %0 = vector.load %arg2[%c0, %c0_0, %c0_1] : memref<1x8x32xf32, #tpu.memory_space<vmem>>, vector<1x8x32xf32>
    %1 = vector.shape_cast %0 : vector<1x8x32xf32> to vector<8x32xf32>
    %c0_2 = arith.constant 0 : index
    %c0_3 = arith.constant 0 : index
    %2 = vector.load %arg5[%c0_2, %c0_3] : memref<8x32xf32, #tpu.memory_space<vmem>>, vector<8x32xf32>
    %3 = arith.mulf %1, %2 : vector<8x32xf32>
    %c0_4 = arith.constant 0 : index
    %c0_5 = arith.constant 0 : index
    %c0_6 = arith.constant 0 : index
    %4 = vector.load %arg3[%c0_4, %c0_5, %c0_6] : memref<1x8x32xf32, #tpu.memory_space<vmem>>, vector<1x8x32xf32>
    %5 = vector.shape_cast %4 : vector<1x8x32xf32> to vector<8x32xf32>
    %c0_7 = arith.constant 0 : index
    %c0_8 = arith.constant 0 : index
    %c0_9 = arith.constant 0 : index
    %6 = vector.load %arg4[%c0_7, %c0_8, %c0_9] : memref<1x8x32xf32, #tpu.memory_space<vmem>>, vector<1x8x32xf32>
    %7 = vector.shape_cast %6 : vector<1x8x32xf32> to vector<8x32xf32>
    %c0_10 = arith.constant 0 : index
    %c0_11 = arith.constant 0 : index
    %8 = vector.load %arg6[%c0_10, %c0_11] : memref<32x32xf32, #tpu.memory_space<vmem>>, vector<32x32xf32>
    %c8_i32 = arith.constant 8 : i32
    %9 = arith.muli %arg1, %c8_i32 : i32
    %10 = tpu.iota {dimensions = array<i32: 0>} : vector<8x8xi32>
    %11 = vector.broadcast %9 : i32 to vector<8x8xi32>
    %12 = arith.addi %11, %10 : vector<8x8xi32>
    %13 = tpu.iota {dimensions = array<i32: 1>} : vector<8x8xi32>
    %14 = arith.cmpi sge, %12, %13 : vector<8x8xi32>
    %cst = arith.constant 0.000000e+00 : f32
    %15 = vector.broadcast %cst : f32 to vector<8x32xf32>
    %16 = vector.extract_strided_slice %3 {offsets = [0, 0], sizes = [8, 8], strides = [1, 1]} : vector<8x32xf32> to vector<8x8xf32>
    %17 = vector.extract_strided_slice %5 {offsets = [0, 0], sizes = [8, 8], strides = [1, 1]} : vector<8x32xf32> to vector<8x8xf32>
    %cst_12 = arith.constant dense<0.000000e+00> : vector<8x8xf32>
    %18 = tpu.matmul %16, %17, %cst_12 {dimension_numbers = #tpu.dot_dimension_numbers<[1], [1], [0], [0], [0, 0, 1, 0], [], []>} : vector<8x8xf32>, vector<8x8xf32>, vector<8x8xf32> -> vector<8x8xf32>
    %cst_13 = arith.constant 0.000000e+00 : f32
    %19 = vector.broadcast %cst_13 : f32 to vector<8x8xf32>
    %20 = arith.select %14, %18, %19 : vector<8x8xi1>, vector<8x8xf32>
    %21 = vector.extract_strided_slice %7 {offsets = [0, 0], sizes = [8, 8], strides = [1, 1]} : vector<8x32xf32> to vector<8x8xf32>
    %cst_14 = arith.constant dense<0.000000e+00> : vector<8x8xf32>
    %22 = tpu.matmul %20, %21, %cst_14 {dimension_numbers = #tpu.dot_dimension_numbers<[1], [0], [0], [1], [0, 0, 1, 1], [], []>} : vector<8x8xf32>, vector<8x8xf32>, vector<8x8xf32> -> vector<8x8xf32>
    %23 = vector.extract_strided_slice %8 {offsets = [0, 0], sizes = [8, 32], strides = [1, 1]} : vector<32x32xf32> to vector<8x32xf32>
    %cst_15 = arith.constant dense<0.000000e+00> : vector<8x32xf32>
    %24 = tpu.matmul %22, %23, %cst_15 {dimension_numbers = #tpu.dot_dimension_numbers<[1], [0], [0], [1], [0, 0, 1, 1], [], []>} : vector<8x8xf32>, vector<8x32xf32>, vector<8x32xf32> -> vector<8x32xf32>
    %25 = arith.addf %15, %24 : vector<8x32xf32>
    %26 = vector.extract_strided_slice %3 {offsets = [0, 8], sizes = [8, 8], strides = [1, 1]} : vector<8x32xf32> to vector<8x8xf32>
    %27 = vector.extract_strided_slice %5 {offsets = [0, 8], sizes = [8, 8], strides = [1, 1]} : vector<8x32xf32> to vector<8x8xf32>
    %cst_16 = arith.constant dense<0.000000e+00> : vector<8x8xf32>
    %28 = tpu.matmul %26, %27, %cst_16 {dimension_numbers = #tpu.dot_dimension_numbers<[1], [1], [0], [0], [0, 0, 1, 0], [], []>} : vector<8x8xf32>, vector<8x8xf32>, vector<8x8xf32> -> vector<8x8xf32>
    %cst_17 = arith.constant 0.000000e+00 : f32
    %29 = vector.broadcast %cst_17 : f32 to vector<8x8xf32>
    %30 = arith.select %14, %28, %29 : vector<8x8xi1>, vector<8x8xf32>
    %31 = vector.extract_strided_slice %7 {offsets = [0, 8], sizes = [8, 8], strides = [1, 1]} : vector<8x32xf32> to vector<8x8xf32>
    %cst_18 = arith.constant dense<0.000000e+00> : vector<8x8xf32>
    %32 = tpu.matmul %30, %31, %cst_18 {dimension_numbers = #tpu.dot_dimension_numbers<[1], [0], [0], [1], [0, 0, 1, 1], [], []>} : vector<8x8xf32>, vector<8x8xf32>, vector<8x8xf32> -> vector<8x8xf32>
    %33 = vector.extract_strided_slice %8 {offsets = [8, 0], sizes = [8, 32], strides = [1, 1]} : vector<32x32xf32> to vector<8x32xf32>
    %cst_19 = arith.constant dense<0.000000e+00> : vector<8x32xf32>
    %34 = tpu.matmul %32, %33, %cst_19 {dimension_numbers = #tpu.dot_dimension_numbers<[1], [0], [0], [1], [0, 0, 1, 1], [], []>} : vector<8x8xf32>, vector<8x32xf32>, vector<8x32xf32> -> vector<8x32xf32>
    %35 = arith.addf %25, %34 : vector<8x32xf32>
    %36 = vector.extract_strided_slice %3 {offsets = [0, 16], sizes = [8, 8], strides = [1, 1]} : vector<8x32xf32> to vector<8x8xf32>
    %37 = vector.extract_strided_slice %5 {offsets = [0, 16], sizes = [8, 8], strides = [1, 1]} : vector<8x32xf32> to vector<8x8xf32>
    %cst_20 = arith.constant dense<0.000000e+00> : vector<8x8xf32>
    %38 = tpu.matmul %36, %37, %cst_20 {dimension_numbers = #tpu.dot_dimension_numbers<[1], [1], [0], [0], [0, 0, 1, 0], [], []>} : vector<8x8xf32>, vector<8x8xf32>, vector<8x8xf32> -> vector<8x8xf32>
    %cst_21 = arith.constant 0.000000e+00 : f32
    %39 = vector.broadcast %cst_21 : f32 to vector<8x8xf32>
    %40 = arith.select %14, %38, %39 : vector<8x8xi1>, vector<8x8xf32>
    %41 = vector.extract_strided_slice %7 {offsets = [0, 16], sizes = [8, 8], strides = [1, 1]} : vector<8x32xf32> to vector<8x8xf32>
    %cst_22 = arith.constant dense<0.000000e+00> : vector<8x8xf32>
    %42 = tpu.matmul %40, %41, %cst_22 {dimension_numbers = #tpu.dot_dimension_numbers<[1], [0], [0], [1], [0, 0, 1, 1], [], []>} : vector<8x8xf32>, vector<8x8xf32>, vector<8x8xf32> -> vector<8x8xf32>
    %43 = vector.extract_strided_slice %8 {offsets = [16, 0], sizes = [8, 32], strides = [1, 1]} : vector<32x32xf32> to vector<8x32xf32>
    %cst_23 = arith.constant dense<0.000000e+00> : vector<8x32xf32>
    %44 = tpu.matmul %42, %43, %cst_23 {dimension_numbers = #tpu.dot_dimension_numbers<[1], [0], [0], [1], [0, 0, 1, 1], [], []>} : vector<8x8xf32>, vector<8x32xf32>, vector<8x32xf32> -> vector<8x32xf32>
    %45 = arith.addf %35, %44 : vector<8x32xf32>
    %46 = vector.extract_strided_slice %3 {offsets = [0, 24], sizes = [8, 8], strides = [1, 1]} : vector<8x32xf32> to vector<8x8xf32>
    %47 = vector.extract_strided_slice %5 {offsets = [0, 24], sizes = [8, 8], strides = [1, 1]} : vector<8x32xf32> to vector<8x8xf32>
    %cst_24 = arith.constant dense<0.000000e+00> : vector<8x8xf32>
    %48 = tpu.matmul %46, %47, %cst_24 {dimension_numbers = #tpu.dot_dimension_numbers<[1], [1], [0], [0], [0, 0, 1, 0], [], []>} : vector<8x8xf32>, vector<8x8xf32>, vector<8x8xf32> -> vector<8x8xf32>
    %cst_25 = arith.constant 0.000000e+00 : f32
    %49 = vector.broadcast %cst_25 : f32 to vector<8x8xf32>
    %50 = arith.select %14, %48, %49 : vector<8x8xi1>, vector<8x8xf32>
    %51 = vector.extract_strided_slice %7 {offsets = [0, 24], sizes = [8, 8], strides = [1, 1]} : vector<8x32xf32> to vector<8x8xf32>
    %cst_26 = arith.constant dense<0.000000e+00> : vector<8x8xf32>
    %52 = tpu.matmul %50, %51, %cst_26 {dimension_numbers = #tpu.dot_dimension_numbers<[1], [0], [0], [1], [0, 0, 1, 1], [], []>} : vector<8x8xf32>, vector<8x8xf32>, vector<8x8xf32> -> vector<8x8xf32>
    %53 = vector.extract_strided_slice %8 {offsets = [24, 0], sizes = [8, 32], strides = [1, 1]} : vector<32x32xf32> to vector<8x32xf32>
    %cst_27 = arith.constant dense<0.000000e+00> : vector<8x32xf32>
    %54 = tpu.matmul %52, %53, %cst_27 {dimension_numbers = #tpu.dot_dimension_numbers<[1], [0], [0], [1], [0, 0, 1, 1], [], []>} : vector<8x8xf32>, vector<8x32xf32>, vector<8x32xf32> -> vector<8x32xf32>
    %55 = arith.addf %45, %54 : vector<8x32xf32>
    %c0_28 = arith.constant 0 : index
    %c0_29 = arith.constant 0 : index
    %56 = vector.load %arg7[%c0_28, %c0_29] : memref<1x32xf32, #tpu.memory_space<vmem>>, vector<1x32xf32>
    %57 = vector.broadcast %56 : vector<1x32xf32> to vector<8x32xf32>
    %58 = arith.addf %55, %57 : vector<8x32xf32>
    %c0_30 = arith.constant 0 : index
    %c0_31 = arith.constant 0 : index
    %c0_32 = arith.constant 0 : index
    %59 = vector.load %arg8[%c0_30, %c0_31, %c0_32] : memref<1x8x32xf32, #tpu.memory_space<vmem>>, vector<1x8x32xf32>
    %60 = vector.shape_cast %59 : vector<1x8x32xf32> to vector<8x32xf32>
    %61 = vector.shape_cast %58 : vector<8x32xf32> to vector<1x8x32xf32>
    tpu.vector_store %arg8[%c0_30, %c0_31, %c0_32], %61 {strides = array<i32>} : memref<1x8x32xf32, #tpu.memory_space<vmem>>, vector<1x8x32xf32>,
    return
  }
  func.func @transform_0(%arg0: i32, %arg1: i32) -> (i32, i32, i32) {
    %c0_i32 = arith.constant 0 : i32
    %c0_i32_0 = arith.constant 0 : i32
    return %arg0, %arg1, %c0_i32 : i32, i32, i32
  }
  func.func @transform_1(%arg0: i32, %arg1: i32) -> (i32, i32, i32) {
    %c0_i32 = arith.constant 0 : i32
    %c0_i32_0 = arith.constant 0 : i32
    %c0_i32_1 = arith.constant 0 : i32
    return %arg0, %c0_i32, %c0_i32_0 : i32, i32, i32
  }
  func.func @transform_2(%arg0: i32, %arg1: i32) -> (i32, i32, i32) {
    %c0_i32 = arith.constant 0 : i32
    %c0_i32_0 = arith.constant 0 : i32
    %c0_i32_1 = arith.constant 0 : i32
    return %arg0, %c0_i32, %c0_i32_0 : i32, i32, i32
  }
  func.func @transform_3(%arg0: i32, %arg1: i32) -> (i32, i32) {
    %c0_i32 = arith.constant 0 : i32
    %c0_i32_0 = arith.constant 0 : i32
    return %arg1, %c0_i32 : i32, i32
  }
  func.func @transform_4(%arg0: i32, %arg1: i32) -> (i32, i32) {
    %c0_i32 = arith.constant 0 : i32
    %c0_i32_0 = arith.constant 0 : i32
    %c0_i32_1 = arith.constant 0 : i32
    return %c0_i32, %c0_i32_0 : i32, i32
  }
  func.func @transform_5(%arg0: i32, %arg1: i32) -> (i32, i32) {
    %c0_i32 = arith.constant 0 : i32
    %c0_i32_0 = arith.constant 0 : i32
    %c0_i32_1 = arith.constant 0 : i32
    return %c0_i32, %c0_i32_0 : i32, i32
  }
  func.func @transform_6(%arg0: i32, %arg1: i32) -> (i32, i32, i32) {
    %c0_i32 = arith.constant 0 : i32
    %c0_i32_0 = arith.constant 0 : i32
    return %arg0, %arg1, %c0_i32 : i32, i32, i32
  }
}

</mosaic_0001>

<llo_original>
// kernel: retentive_attention.2
$region0: #{retentive_attention.2}
  #allocation0 [shape = 'u32[]', space=smem, size = 0x4, offset = 0x4, fixed_abs, tag = 'smem constant byte address 0x4 - core index']
  #allocation1 [shape = 'u32[144,128]{1,0:T(1,128)}', space=vmem, size = 0x12000, scoped, tag = 'internal scratch']
  #allocation2 [shape = 'f32[16,32]{1,0:T(8,128)}', space=vmem, size = 0x2000, scoped, tag = 'scratch operand']
  #allocation3 [shape = 'f32[16,32]{1,0:T(8,128)}', space=vmem, size = 0x2000, scoped, tag = 'scratch operand']
  #allocation4 [shape = 'f32[16,32]{1,0:T(8,128)}', space=vmem, size = 0x2000, scoped, tag = 'scratch operand']
  %s0 = inlined_call_operand.vmem [shape: f32[16,32], index: 0, kind: input, shape index: {}]
  %s1 = inlined_call_operand.vmem [shape: f32[32,32], index: 1, kind: input, shape index: {}]
  %s2 = inlined_call_operand.vmem [shape: f32[32,32], index: 2, kind: input, shape index: {}]
  %s3 = inlined_call_operand.vmem [shape: f32[32,32], index: 3, kind: input, shape index: {}]
  %s4 = inlined_call_operand.vmem [shape: f32[1,32], index: 4, kind: input, shape index: {}]
  %s5 = inlined_call_operand.vmem [shape: f32[1,32], index: 5, kind: input, shape index: {}]
  %s6 = inlined_call_operand.vmem [shape: f32[1,32], index: 6, kind: input, shape index: {}]
  %s7 = inlined_call_operand.vmem [shape: f32[16,32], index: 7, kind: output, shape index: {0}]
  %s8 = inlined_call_operand.vmem [shape: f32[16,32], index: 8, kind: output, shape index: {1}]
  %s9 = inlined_call_operand.vmem [shape: f32[16,32], index: 9, kind: output, shape index: {2}]
  %10 = xla_tuple %s7, %s8, %s9
  %s11 = sld [smem:[#allocation0]]
  $region62: #{retentive_attention.2} parent=0
    _
  %s13 = ssub.s32 1, %s11
  %s14 = scalar_select 0, %s13, %s11
  // Predicated region
  $region2: #{retentive_attention.2} parent=0 // pred_check
    _
  $region3: #{retentive_attention.2} parent=0 // pred_check_branch
    %16 = sbr.rel (0) target = $region5
  $region4: #{retentive_attention.2} parent=0 // pred_region
    _
  $region5: #{retentive_attention.2} parent=0 // pred_fallthru
    _
  // Predicated region
  $region6: #{retentive_attention.2} parent=0 // pred_check
    _
  $region7: #{retentive_attention.2} parent=0 // pred_check_branch
    %18 = sbr.rel (0) target = $region9
  $region8: #{retentive_attention.2} parent=0 // pred_region
    _
  $region9: #{retentive_attention.2} parent=0 // pred_fallthru
    _
  // Predicated region
  $region10: #{retentive_attention.2} parent=0 // pred_check
    _
  $region11: #{retentive_attention.2} parent=0 // pred_check_branch
    %20 = sbr.rel (0) target = $region13
  $region12: #{retentive_attention.2} parent=0 // pred_region
    _
  $region13: #{retentive_attention.2} parent=0 // pred_fallthru
    _
  // Predicated region
  $region14: #{retentive_attention.2} parent=0 // pred_check
    _
  $region15: #{retentive_attention.2} parent=0 // pred_check_branch
    %22 = sbr.rel (0) target = $region17
  $region16: #{retentive_attention.2} parent=0 // pred_region
    _
  $region17: #{retentive_attention.2} parent=0 // pred_fallthru
    _
  // Predicated region
  $region18: #{retentive_attention.2} parent=0 // pred_check
    _
  $region19: #{retentive_attention.2} parent=0 // pred_check_branch
    %24 = sbr.rel (0) target = $region21
  $region20: #{retentive_attention.2} parent=0 // pred_region
    _
  $region21: #{retentive_attention.2} parent=0 // pred_fallthru
    _
  // Predicated region
  $region22: #{retentive_attention.2} parent=0 // pred_check
    _
  $region23: #{retentive_attention.2} parent=0 // pred_check_branch
    %26 = sbr.rel (0) target = $region25
  $region24: #{retentive_attention.2} parent=0 // pred_region
    _
  $region25: #{retentive_attention.2} parent=0 // pred_fallthru
    _
  // Predicated region
  $region26: #{retentive_attention.2} parent=0 // pred_check
    _
  $region27: #{retentive_attention.2} parent=0 // pred_check_branch
    %28 = sbr.rel (0) target = $region29
  $region28: #{retentive_attention.2} parent=0 // pred_region
    _
  $region29: #{retentive_attention.2} parent=0 // pred_fallthru
    _
  %p29 = scmp.eq.s32.totalorder 0, 0
  // Predicated region
  $region30: #{retentive_attention.2} parent=0 // pred_check
    %p30 = pneg %p29
  $region31: #{retentive_attention.2} parent=0 // pred_check_branch
    %32 = sbr.rel (%p30) target = $region33
  $region32: #{retentive_attention.2} parent=0 // pred_region
    %vm33 = vcmask 261120
    %34 = vst.msk [vmem:[#allocation2] sm:$0xff] %vm33, 0.0
    %35 = vst.msk [vmem:[#allocation2 + $0x8] sm:$0xff] %vm33, 0.0
    %36 = vst.msk [vmem:[#allocation3] sm:$0xff] %vm33, 0.0
    %37 = vst.msk [vmem:[#allocation3 + $0x8] sm:$0xff] %vm33, 0.0
    %38 = vst.msk [vmem:[#allocation4] sm:$0xff] %vm33, 0.0
    %39 = vst.msk [vmem:[#allocation4 + $0x8] sm:$0xff] %vm33, 0.0
  $region33: #{retentive_attention.2} parent=0 // pred_fallthru
    _
  %v40 = vld [vmem:[%s0] sm:$0xff]
  %v41 = vld [vmem:[%s0 + $0x8] sm:$0xff]
  %v42 = vld [vmem:[#allocation2] sm:$0xff]
  %v43 = vld [vmem:[#allocation2 + $0x8] sm:$0xff]
  %v44 = vld [vmem:[%s1] sm:$0xff]
  %v45 = vld [vmem:[%s1 + $0x8] sm:$0xff]
  %v46 = vld [vmem:[%s1 + $0x10] sm:$0xff]
  %v47 = vld [vmem:[%s1 + $0x18] sm:$0xff]
  %vm48 = vcmask 261120
  %v50 = vsel %vm48, %v40, 0
  %v53 = vsel %vm48, %v41, 0
  %55 = vmatprep.subr.mxu0 0.0
  %56 = vmatpush1.msra.mxu0 0.0
  %57 = vmatprep.subr.mxu0 0.0
  %58 = vmatpush1.msra.mxu0 0.0
  %59 = vmatprep.subr.mxu0 0.0
  %60 = vmatpush1.msra.mxu0 0.0
  %61 = vmatprep.subr.mxu0 0.0
  %62 = vmatpush1.msra.mxu0 0.0
  %63 = vmatprep.subr.mxu0 0.0
  %64 = vmatpush1.msra.mxu0 0.0
  %65 = vmatprep.subr.mxu0 0.0
  %66 = vmatpush1.msra.mxu0 0.0
  %67 = vmatprep.subr.mxu0 0.0
  %68 = vmatpush1.msra.mxu0 0.0
  %69 = vmatprep.subr.mxu0 0.0
  %70 = vmatpush1.msra.mxu0 0.0
  %71 = vmatprep.subr.mxu0 0.0
  %72 = vmatpush1.msra.mxu0 0.0
  %73 = vmatprep.subr.mxu0 0.0
  %74 = vmatpush1.msra.mxu0 0.0
  %75 = vmatprep.subr.mxu0 0.0
  %76 = vmatpush1.msra.mxu0 0.0
  %77 = vmatprep.subr.mxu0 0.0
  %78 = vmatpush1.msra.mxu0 0.0
  %79 = vmatprep.subr.mxu0 0.0
  %80 = vmatpush1.msra.mxu0 %v47
  %81 = vmatprep.subr.mxu0 0.0
  %82 = vmatpush1.msra.mxu0 %v46
  %83 = vmatprep.subr.mxu0 0.0
  %84 = vmatpush1.msra.mxu0 %v45
  %85 = vmatprep.subr.mxu0 0.0
  %86 = vmatpush1.msra.mxu0 %v44
  %87 = vmatprep.subr.mxu0 0.0
  %88 = vmatpush2.msra.mxu0 0.0
  %89 = vmatprep.subr.mxu0 0.0
  %90 = vmatpush2.msra.mxu0 0.0
  %91 = vmatprep.subr.mxu0 0.0
  %92 = vmatpush2.msra.mxu0 0.0
  %93 = vmatprep.subr.mxu0 0.0
  %94 = vmatpush2.msra.mxu0 0.0
  %95 = vmatprep.subr.mxu0 0.0
  %96 = vmatpush2.msra.mxu0 0.0
  %97 = vmatprep.subr.mxu0 0.0
  %98 = vmatpush2.msra.mxu0 0.0
  %99 = vmatprep.subr.mxu0 0.0
  %100 = vmatpush2.msra.mxu0 0.0
  %101 = vmatprep.subr.mxu0 0.0
  %102 = vmatpush2.msra.mxu0 0.0
  %103 = vmatprep.subr.mxu0 0.0
  %104 = vmatpush2.msra.mxu0 0.0
  %105 = vmatprep.subr.mxu0 0.0
  %106 = vmatpush2.msra.mxu0 0.0
  %107 = vmatprep.subr.mxu0 0.0
  %108 = vmatpush2.msra.mxu0 0.0
  %109 = vmatprep.subr.mxu0 0.0
  %110 = vmatpush2.msra.mxu0 0.0
  %111 = vmatprep.subr.mxu0 0.0
  %112 = vmatpush2.msra.mxu0 0.0
  %113 = vmatprep.subr.mxu0 0.0
  %114 = vmatpush2.msra.mxu0 0.0
  %115 = vmatprep.subr.mxu0 0.0
  %116 = vmatpush2.msra.mxu0 0.0
  %117 = vmatprep.subr.mxu0 0.0
  %118 = vmatpush2.msra.mxu0 0.0
  %119 = vmatprep.mubr.f32.mxu0 0.0
  %120 = vmatmul.mubr.f32.gmra.mxu0 %v50
  %v121 = vpop.f32.mrf.mxu0
  %v122 = vadd.f32 0.0, %v121
  %v123 = vpop.f32.mrf.mxu0
  %124 = vmatprep.mubr.f32.mxu0 0.0
  %125 = vmatmul.mubr.f32.gmra.mxu0 %v53
  %v126 = vpop.f32.mrf.mxu0
  %v127 = vadd.f32 0.0, %v126
  %v128 = vpop.f32.mrf.mxu0
  %129 = vdwg.mxu0
  %v130 = vadd.f32 %v42, %v122
  %v131 = vadd.f32 %v43, %v127
  %132 = vst.msk [vmem:[#allocation2] sm:$0xff] %vm48, %v130
  %133 = vst.msk [vmem:[#allocation2 + $0x8] sm:$0xff] %vm48, %v131
  %v134 = vld [vmem:[#allocation3] sm:$0xff]
  %v135 = vld [vmem:[#allocation3 + $0x8] sm:$0xff]
  %v136 = vld [vmem:[%s2] sm:$0xff]
  %v137 = vld [vmem:[%s2 + $0x8] sm:$0xff]
  %v138 = vld [vmem:[%s2 + $0x10] sm:$0xff]
  %v139 = vld [vmem:[%s2 + $0x18] sm:$0xff]
  %140 = vmatprep.subr.mxu0 0.0
  %141 = vmatpush1.msra.mxu0 0.0
  %142 = vmatprep.subr.mxu0 0.0
  %143 = vmatpush1.msra.mxu0 0.0
  %144 = vmatprep.subr.mxu0 0.0
  %145 = vmatpush1.msra.mxu0 0.0
  %146 = vmatprep.subr.mxu0 0.0
  %147 = vmatpush1.msra.mxu0 0.0
  %148 = vmatprep.subr.mxu0 0.0
  %149 = vmatpush1.msra.mxu0 0.0
  %150 = vmatprep.subr.mxu0 0.0
  %151 = vmatpush1.msra.mxu0 0.0
  %152 = vmatprep.subr.mxu0 0.0
  %153 = vmatpush1.msra.mxu0 0.0
  %154 = vmatprep.subr.mxu0 0.0
  %155 = vmatpush1.msra.mxu0 0.0
  %156 = vmatprep.subr.mxu0 0.0
  %157 = vmatpush1.msra.mxu0 0.0
  %158 = vmatprep.subr.mxu0 0.0
  %159 = vmatpush1.msra.mxu0 0.0
  %160 = vmatprep.subr.mxu0 0.0
  %161 = vmatpush1.msra.mxu0 0.0
  %162 = vmatprep.subr.mxu0 0.0
  %163 = vmatpush1.msra.mxu0 0.0
  %164 = vmatprep.subr.mxu0 0.0
  %165 = vmatpush1.msra.mxu0 %v139
  %166 = vmatprep.subr.mxu0 0.0
  %167 = vmatpush1.msra.mxu0 %v138
  %168 = vmatprep.subr.mxu0 0.0
  %169 = vmatpush1.msra.mxu0 %v137
  %170 = vmatprep.subr.mxu0 0.0
  %171 = vmatpush1.msra.mxu0 %v136
  %172 = vmatprep.subr.mxu0 0.0
  %173 = vmatpush2.msra.mxu0 0.0
  %174 = vmatprep.subr.mxu0 0.0
  %175 = vmatpush2.msra.mxu0 0.0
  %176 = vmatprep.subr.mxu0 0.0
  %177 = vmatpush2.msra.mxu0 0.0
  %178 = vmatprep.subr.mxu0 0.0
  %179 = vmatpush2.msra.mxu0 0.0
  %180 = vmatprep.subr.mxu0 0.0
  %181 = vmatpush2.msra.mxu0 0.0
  %182 = vmatprep.subr.mxu0 0.0
  %183 = vmatpush2.msra.mxu0 0.0
  %184 = vmatprep.subr.mxu0 0.0
  %185 = vmatpush2.msra.mxu0 0.0
  %186 = vmatprep.subr.mxu0 0.0
  %187 = vmatpush2.msra.mxu0 0.0
  %188 = vmatprep.subr.mxu0 0.0
  %189 = vmatpush2.msra.mxu0 0.0
  %190 = vmatprep.subr.mxu0 0.0
  %191 = vmatpush2.msra.mxu0 0.0
  %192 = vmatprep.subr.mxu0 0.0
  %193 = vmatpush2.msra.mxu0 0.0
  %194 = vmatprep.subr.mxu0 0.0
  %195 = vmatpush2.msra.mxu0 0.0
  %196 = vmatprep.subr.mxu0 0.0
  %197 = vmatpush2.msra.mxu0 0.0
  %198 = vmatprep.subr.mxu0 0.0
  %199 = vmatpush2.msra.mxu0 0.0
  %200 = vmatprep.subr.mxu0 0.0
  %201 = vmatpush2.msra.mxu0 0.0
  %202 = vmatprep.subr.mxu0 0.0
  %203 = vmatpush2.msra.mxu0 0.0
  %204 = vmatprep.mubr.f32.mxu0 0.0
  %205 = vmatmul.mubr.f32.gmra.mxu0 %v50
  %v206 = vpop.f32.mrf.mxu0
  %v207 = vadd.f32 0.0, %v206
  %v208 = vpop.f32.mrf.mxu0
  %209 = vmatprep.mubr.f32.mxu0 0.0
  %210 = vmatmul.mubr.f32.gmra.mxu0 %v53
  %v211 = vpop.f32.mrf.mxu0
  %v212 = vadd.f32 0.0, %v211
  %v213 = vpop.f32.mrf.mxu0
  %214 = vdwg.mxu0
  %v215 = vadd.f32 %v134, %v207
  %v216 = vadd.f32 %v135, %v212
  %217 = vst.msk [vmem:[#allocation3] sm:$0xff] %vm48, %v215
  %218 = vst.msk [vmem:[#allocation3 + $0x8] sm:$0xff] %vm48, %v216
  %v219 = vld [vmem:[#allocation4] sm:$0xff]
  %v220 = vld [vmem:[#allocation4 + $0x8] sm:$0xff]
  %v221 = vld [vmem:[%s3] sm:$0xff]
  %v222 = vld [vmem:[%s3 + $0x8] sm:$0xff]
  %v223 = vld [vmem:[%s3 + $0x10] sm:$0xff]
  %v224 = vld [vmem:[%s3 + $0x18] sm:$0xff]
  %225 = vmatprep.subr.mxu0 0.0
  %226 = vmatpush1.msra.mxu0 0.0
  %227 = vmatprep.subr.mxu0 0.0
  %228 = vmatpush1.msra.mxu0 0.0
  %229 = vmatprep.subr.mxu0 0.0
  %230 = vmatpush1.msra.mxu0 0.0
  %231 = vmatprep.subr.mxu0 0.0
  %232 = vmatpush1.msra.mxu0 0.0
  %233 = vmatprep.subr.mxu0 0.0
  %234 = vmatpush1.msra.mxu0 0.0
  %235 = vmatprep.subr.mxu0 0.0
  %236 = vmatpush1.msra.mxu0 0.0
  %237 = vmatprep.subr.mxu0 0.0
  %238 = vmatpush1.msra.mxu0 0.0
  %239 = vmatprep.subr.mxu0 0.0
  %240 = vmatpush1.msra.mxu0 0.0
  %241 = vmatprep.subr.mxu0 0.0
  %242 = vmatpush1.msra.mxu0 0.0
  %243 = vmatprep.subr.mxu0 0.0
  %244 = vmatpush1.msra.mxu0 0.0
  %245 = vmatprep.subr.mxu0 0.0
  %246 = vmatpush1.msra.mxu0 0.0
  %247 = vmatprep.subr.mxu0 0.0
  %248 = vmatpush1.msra.mxu0 0.0
  %249 = vmatprep.subr.mxu0 0.0
  %250 = vmatpush1.msra.mxu0 %v224
  %251 = vmatprep.subr.mxu0 0.0
  %252 = vmatpush1.msra.mxu0 %v223
  %253 = vmatprep.subr.mxu0 0.0
  %254 = vmatpush1.msra.mxu0 %v222
  %255 = vmatprep.subr.mxu0 0.0
  %256 = vmatpush1.msra.mxu0 %v221
  %257 = vmatprep.subr.mxu0 0.0
  %258 = vmatpush2.msra.mxu0 0.0
  %259 = vmatprep.subr.mxu0 0.0
  %260 = vmatpush2.msra.mxu0 0.0
  %261 = vmatprep.subr.mxu0 0.0
  %262 = vmatpush2.msra.mxu0 0.0
  %263 = vmatprep.subr.mxu0 0.0
  %264 = vmatpush2.msra.mxu0 0.0
  %265 = vmatprep.subr.mxu0 0.0
  %266 = vmatpush2.msra.mxu0 0.0
  %267 = vmatprep.subr.mxu0 0.0
  %268 = vmatpush2.msra.mxu0 0.0
  %269 = vmatprep.subr.mxu0 0.0
  %270 = vmatpush2.msra.mxu0 0.0
  %271 = vmatprep.subr.mxu0 0.0
  %272 = vmatpush2.msra.mxu0 0.0
  %273 = vmatprep.subr.mxu0 0.0
  %274 = vmatpush2.msra.mxu0 0.0
  %275 = vmatprep.subr.mxu0 0.0
  %276 = vmatpush2.msra.mxu0 0.0
  %277 = vmatprep.subr.mxu0 0.0
  %278 = vmatpush2.msra.mxu0 0.0
  %279 = vmatprep.subr.mxu0 0.0
  %280 = vmatpush2.msra.mxu0 0.0
  %281 = vmatprep.subr.mxu0 0.0
  %282 = vmatpush2.msra.mxu0 0.0
  %283 = vmatprep.subr.mxu0 0.0
  %284 = vmatpush2.msra.mxu0 0.0
  %285 = vmatprep.subr.mxu0 0.0
  %286 = vmatpush2.msra.mxu0 0.0
  %287 = vmatprep.subr.mxu0 0.0
  %288 = vmatpush2.msra.mxu0 0.0
  %289 = vmatprep.mubr.f32.mxu0 0.0
  %290 = vmatmul.mubr.f32.gmra.mxu0 %v50
  %v291 = vpop.f32.mrf.mxu0
  %v292 = vadd.f32 0.0, %v291
  %v293 = vpop.f32.mrf.mxu0
  %294 = vmatprep.mubr.f32.mxu0 0.0
  %295 = vmatmul.mubr.f32.gmra.mxu0 %v53
  %v296 = vpop.f32.mrf.mxu0
  %v297 = vadd.f32 0.0, %v296
  %v298 = vpop.f32.mrf.mxu0
  %299 = vdwg.mxu0
  %v300 = vadd.f32 %v219, %v292
  %v301 = vadd.f32 %v220, %v297
  %302 = vst.msk [vmem:[#allocation4] sm:$0xff] %vm48, %v300
  %303 = vst.msk [vmem:[#allocation4 + $0x8] sm:$0xff] %vm48, %v301
  // Predicated region
  $region34: #{retentive_attention.2} parent=0 // pred_check
    %p304 = pneg %p29
  $region35: #{retentive_attention.2} parent=0 // pred_check_branch
    %306 = sbr.rel (%p304) target = $region37
  $region36: #{retentive_attention.2} parent=0 // pred_region
    %v307 = vld [vmem:[#allocation2] sm:$0xff]
    %v308 = vld [vmem:[#allocation2 + $0x8] sm:$0xff]
    %v309 = vld [vmem:[%s4] sm:$0x1]
    %v311 = vlaneseq
    %v312 = vshrl.u32 %v311, 7
    %v313 = vsub.s32 0, %v312
    %v314 = vrot.slane %v309, %v313
    %v316 = vadd.f32 %v307, %v314
    %v317 = vadd.f32 %v308, %v314
    %318 = vst.msk [vmem:[%s7] sm:$0xff] %vm48, %v316
    %319 = vst.msk [vmem:[%s7 + $0x8] sm:$0xff] %vm48, %v317
    %v320 = vld [vmem:[#allocation3] sm:$0xff]
    %v321 = vld [vmem:[#allocation3 + $0x8] sm:$0xff]
    %v322 = vld [vmem:[%s5] sm:$0x1]
    %v324 = vlaneseq
    %v325 = vshrl.u32 %v324, 7
    %v326 = vsub.s32 0, %v325
    %v327 = vrot.slane %v322, %v326
    %v329 = vadd.f32 %v320, %v327
    %v330 = vadd.f32 %v321, %v327
    %331 = vst.msk [vmem:[%s8] sm:$0xff] %vm48, %v329
    %332 = vst.msk [vmem:[%s8 + $0x8] sm:$0xff] %vm48, %v330
    %v333 = vld [vmem:[#allocation4] sm:$0xff]
    %v334 = vld [vmem:[#allocation4 + $0x8] sm:$0xff]
    %v335 = vld [vmem:[%s6] sm:$0x1]
    %v337 = vlaneseq
    %v338 = vshrl.u32 %v337, 7
    %v339 = vsub.s32 0, %v338
    %v340 = vrot.slane %v335, %v339
    %v342 = vadd.f32 %v333, %v340
    %v343 = vadd.f32 %v334, %v340
    %344 = vst.msk [vmem:[%s9] sm:$0xff] %vm48, %v342
    %345 = vst.msk [vmem:[%s9 + $0x8] sm:$0xff] %vm48, %v343
  $region37: #{retentive_attention.2} parent=0 // pred_fallthru
    _
  // Predicated region
  $region38: #{retentive_attention.2} parent=0 // pred_check
    _
  $region39: #{retentive_attention.2} parent=0 // pred_check_branch
    %347 = sbr.rel (0) target = $region41
  $region40: #{retentive_attention.2} parent=0 // pred_region
    _
  $region41: #{retentive_attention.2} parent=0 // pred_fallthru
    _
  // Predicated region
  $region42: #{retentive_attention.2} parent=0 // pred_check
    _
  $region43: #{retentive_attention.2} parent=0 // pred_check_branch
    %349 = sbr.rel (0) target = $region45
  $region44: #{retentive_attention.2} parent=0 // pred_region
    _
  $region45: #{retentive_attention.2} parent=0 // pred_fallthru
    _
  // Predicated region
  $region46: #{retentive_attention.2} parent=0 // pred_check
    _
  $region47: #{retentive_attention.2} parent=0 // pred_check_branch
    %351 = sbr.rel (0) target = $region49
  $region48: #{retentive_attention.2} parent=0 // pred_region
    _
  $region49: #{retentive_attention.2} parent=0 // pred_fallthru
    _
  // Predicated region
  $region50: #{retentive_attention.2} parent=0 // pred_check
    _
  $region51: #{retentive_attention.2} parent=0 // pred_check_branch
    %353 = sbr.rel (0) target = $region53
  $region52: #{retentive_attention.2} parent=0 // pred_region
    _
  $region53: #{retentive_attention.2} parent=0 // pred_fallthru
    _
  // Predicated region
  $region54: #{retentive_attention.2} parent=0 // pred_check
    _
  $region55: #{retentive_attention.2} parent=0 // pred_check_branch
    %355 = sbr.rel (0) target = $region57
  $region56: #{retentive_attention.2} parent=0 // pred_region
    _
  $region57: #{retentive_attention.2} parent=0 // pred_fallthru
    _
  // Predicated region
  $region58: #{retentive_attention.2} parent=0 // pred_check
    _
  $region59: #{retentive_attention.2} parent=0 // pred_check_branch
    %357 = sbr.rel (0) target = $region61
  $region60: #{retentive_attention.2} parent=0 // pred_region
    _
  $region61: #{retentive_attention.2} parent=0 // pred_fallthru
    _

// kernel: retentive_attention.3
$region0: #{retentive_attention.3}
  #allocation0 [shape = 'u32[]', space=smem, size = 0x4, offset = 0x4, fixed_abs, tag = 'smem constant byte address 0x4 - core index']
  #allocation1 [shape = 'u32[144,128]{1,0:T(1,128)}', space=vmem, size = 0x12000, scoped, tag = 'internal scratch']
  %s0 = inlined_call_operand.vmem [shape: f32[2,8,32], index: 0, kind: input, shape index: {}]
  %s1 = inlined_call_operand.vmem [shape: f32[2,8,32], index: 1, kind: input, shape index: {}]
  %s2 = inlined_call_operand.vmem [shape: f32[2,8,32], index: 2, kind: input, shape index: {}]
  %s3 = inlined_call_operand.vmem [shape: f32[8,32], index: 3, kind: input, shape index: {}]
  %s4 = inlined_call_operand.vmem [shape: f32[32,32], index: 4, kind: input, shape index: {}]
  %s5 = inlined_call_operand.vmem [shape: f32[1,32], index: 5, kind: input, shape index: {}]
  %s6 = inlined_call_operand.hbm [shape: f32[2,8,32], index: 6, kind: output, shape index: {}]
  %s7 = sld [smem:[#allocation0]]
  $region57: #{retentive_attention.3} parent=0
    _
  %s9 = ssub.s32 1, %s7
  %s10 = scalar_select 0, %s9, %s7
  $region1: #{retentive_attention.3} parent=0
    #allocation2 [shape = 'u8[8192]{0}', space=vmem, size = 0x2000, scoped, tag = 'output window, operand 0']
    #allocation3 [shape = 's32[2]{0}', space=sflag, size = 0x8, scoped, tag = 'scoped memory for retentive_attention.3']
    %11 = vsyncpa [#allocation3], 0
    %s12 = scalar_lea.sflag [#allocation3], 1
    %13 = vsyncpa %s12, 0
    loop: start=0, step=1, limit=4
    $region2: #{retentive_attention.3} parent=1 // loop_pre_header
      _
    $region3: #{retentive_attention.3} parent=1 // loop_header
      %s15 = sphi 0, %s19
      %p16 = scmp.ge.s32.totalorder %s15, 4
      %s22 = sphi 0, %s34
      %s23 = sphi 0, %s30
      %s24 = sphi 0, %s22
      %s25 = sphi 0, %s23
      %s26 = sphi 0, %s24
      %s27 = sphi 0, %s25
      %s39 = sphi 0, %s41
      %s42 = sphi 0, %s39
      %s43 = sphi 0, %s42
      %s59 = sphi 0, %s43
      %s65 = sphi 0, %s67
      %s68 = sphi 0, %s65
      %s69 = sphi 0, %s68
      %s85 = sphi 0, %s69
      %s91 = sphi 0, %s93
      %s94 = sphi 0, %s91
      %s95 = sphi 0, %s94
      %s111 = sphi 0, %s95
      %s117 = sphi 0, %s119
      %s120 = sphi 0, %s117
      %s121 = sphi 0, %s120
      %s137 = sphi 0, %s121
      %s141 = sphi 0, %s141
      %s143 = sphi 0, %s141
      %s144 = sphi 0, %s143
      %s158 = sphi 0, %s144
      %s162 = sphi 0, %s162
      %s164 = sphi 0, %s162
      %s165 = sphi 0, %s164
      %s179 = sphi 0, %s165
      %s187 = sphi 0, %s189
      %s190 = sphi 0, %s187
      %s191 = sphi 0, %s190
      %s207 = sphi 0, %s191
    $region4: #{retentive_attention.3} parent=1 // loop_header_branch
      %18 = sbr.rel (%p16) target = $region8
    $region5: #{retentive_attention.3} parent=1 // loop_body
      %s20 = ssub.s32 %s15, 1
      %s21 = ssub.s32 %s15, 2
      %s28 = sadd.s32 1, %s23
      %p29 = scmp.ge.s32.totalorder %s28, 1
      %s30 = scalar_select %p29, 0, %s28
      %s31 = sadd.s32 1, %s22
      %s32 = scalar_select %p29, %s31, %s22
      %p33 = scmp.ge.s32.totalorder %s32, 2
      %s34 = scalar_select %p33, 0, %s32
      %s35 = ssub.s32 %s22, %s34
      %s36 = ssub.s32 %s23, %s30
      %s37 = sor.u32 %s35, %s36
      %p38 = scmp.eq.s32.totalorder %s37, 0
      %s40 = sadd.s32 %s39, 1
      %s41 = scalar_select %p38, %s39, %s40
      %p44 = pneg %p38
      %p45 = scmp.eq.s32.totalorder %s15, 1
      %p46 = por %p44, %p45
      %p47 = scmp.ne.s32.totalorder %s39, %s42
      %p48 = scmp.eq.s32.totalorder %s15, 0
      %p49 = por %p47, %p48
      %p50 = scmp.ne.s32.totalorder %s39, %s42
      %p51 = scmp.eq.s32.totalorder %s20, 1
      %p52 = por %p50, %p51
      %p53 = scmp.ne.s32.totalorder %s42, %s43
      %p54 = scmp.eq.s32.totalorder %s20, 0
      %p55 = por %p53, %p54
      %p56 = scmp.ne.s32.totalorder %s42, %s43
      %p57 = scmp.eq.s32.totalorder %s21, 1
      %p58 = por %p56, %p57
      %p60 = scmp.ne.s32.totalorder %s43, %s59
      %p61 = scmp.eq.s32.totalorder %s21, 0
      %p62 = por %p60, %p61
      %s63 = ssub.s32 %s22, %s34
      %p64 = scmp.eq.s32.totalorder %s63, 0
      %s66 = sadd.s32 %s65, 1
      %s67 = scalar_select %p64, %s65, %s66
      %p70 = pneg %p64
      %p71 = scmp.eq.s32.totalorder %s15, 1
      %p72 = por %p70, %p71
      %p73 = scmp.ne.s32.totalorder %s65, %s68
      %p74 = scmp.eq.s32.totalorder %s15, 0
      %p75 = por %p73, %p74
      %p76 = scmp.ne.s32.totalorder %s65, %s68
      %p77 = scmp.eq.s32.totalorder %s20, 1
      %p78 = por %p76, %p77
      %p79 = scmp.ne.s32.totalorder %s68, %s69
      %p80 = scmp.eq.s32.totalorder %s20, 0
      %p81 = por %p79, %p80
      %p82 = scmp.ne.s32.totalorder %s68, %s69
      %p83 = scmp.eq.s32.totalorder %s21, 1
      %p84 = por %p82, %p83
      %p86 = scmp.ne.s32.totalorder %s69, %s85
      %p87 = scmp.eq.s32.totalorder %s21, 0
      %p88 = por %p86, %p87
      %s89 = ssub.s32 %s22, %s34
      %p90 = scmp.eq.s32.totalorder %s89, 0
      %s92 = sadd.s32 %s91, 1
      %s93 = scalar_select %p90, %s91, %s92
      %p96 = pneg %p90
      %p97 = scmp.eq.s32.totalorder %s15, 1
      %p98 = por %p96, %p97
      %p99 = scmp.ne.s32.totalorder %s91, %s94
      %p100 = scmp.eq.s32.totalorder %s15, 0
      %p101 = por %p99, %p100
      %p102 = scmp.ne.s32.totalorder %s91, %s94
      %p103 = scmp.eq.s32.totalorder %s20, 1
      %p104 = por %p102, %p103
      %p105 = scmp.ne.s32.totalorder %s94, %s95
      %p106 = scmp.eq.s32.totalorder %s20, 0
      %p107 = por %p105, %p106
      %p108 = scmp.ne.s32.totalorder %s94, %s95
      %p109 = scmp.eq.s32.totalorder %s21, 1
      %p110 = por %p108, %p109
      %p112 = scmp.ne.s32.totalorder %s95, %s111
      %p113 = scmp.eq.s32.totalorder %s21, 0
      %p114 = por %p112, %p113
      %s115 = ssub.s32 %s23, %s30
      %p116 = scmp.eq.s32.totalorder %s115, 0
      %s118 = sadd.s32 %s117, 1
      %s119 = scalar_select %p116, %s117, %s118
      %p122 = pneg %p116
      %p123 = scmp.eq.s32.totalorder %s15, 1
      %p124 = por %p122, %p123
      %p125 = scmp.ne.s32.totalorder %s117, %s120
      %p126 = scmp.eq.s32.totalorder %s15, 0
      %p127 = por %p125, %p126
      %p128 = scmp.ne.s32.totalorder %s117, %s120
      %p129 = scmp.eq.s32.totalorder %s20, 1
      %p130 = por %p128, %p129
      %p131 = scmp.ne.s32.totalorder %s120, %s121
      %p132 = scmp.eq.s32.totalorder %s20, 0
      %p133 = por %p131, %p132
      %p134 = scmp.ne.s32.totalorder %s120, %s121
      %p135 = scmp.eq.s32.totalorder %s21, 1
      %p136 = por %p134, %p135
      %p138 = scmp.ne.s32.totalorder %s121, %s137
      %p139 = scmp.eq.s32.totalorder %s21, 0
      %p140 = por %p138, %p139
      %s142 = sadd.s32 %s141, 1
      %p145 = scmp.eq.s32.totalorder %s15, 1
      %p146 = scmp.ne.s32.totalorder %s141, %s143
      %p147 = scmp.eq.s32.totalorder %s15, 0
      %p148 = por %p146, %p147
      %p149 = scmp.ne.s32.totalorder %s141, %s143
      %p150 = scmp.eq.s32.totalorder %s20, 1
      %p151 = por %p149, %p150
      %p152 = scmp.ne.s32.totalorder %s143, %s144
      %p153 = scmp.eq.s32.totalorder %s20, 0
      %p154 = por %p152, %p153
      %p155 = scmp.ne.s32.totalorder %s143, %s144
      %p156 = scmp.eq.s32.totalorder %s21, 1
      %p157 = por %p155, %p156
      %p159 = scmp.ne.s32.totalorder %s144, %s158
      %p160 = scmp.eq.s32.totalorder %s21, 0
      %p161 = por %p159, %p160
      %s163 = sadd.s32 %s162, 1
      %p166 = scmp.eq.s32.totalorder %s15, 1
      %p167 = scmp.ne.s32.totalorder %s162, %s164
      %p168 = scmp.eq.s32.totalorder %s15, 0
      %p169 = por %p167, %p168
      %p170 = scmp.ne.s32.totalorder %s162, %s164
      %p171 = scmp.eq.s32.totalorder %s20, 1
      %p172 = por %p170, %p171
      %p173 = scmp.ne.s32.totalorder %s164, %s165
      %p174 = scmp.eq.s32.totalorder %s20, 0
      %p175 = por %p173, %p174
      %p176 = scmp.ne.s32.totalorder %s164, %s165
      %p177 = scmp.eq.s32.totalorder %s21, 1
      %p178 = por %p176, %p177
      %p180 = scmp.ne.s32.totalorder %s165, %s179
      %p181 = scmp.eq.s32.totalorder %s21, 0
      %p182 = por %p180, %p181
      %s183 = ssub.s32 %s22, %s34
      %s184 = ssub.s32 %s23, %s30
      %s185 = sor.u32 %s183, %s184
      %p186 = scmp.eq.s32.totalorder %s185, 0
      %s188 = sadd.s32 %s187, 1
      %s189 = scalar_select %p186, %s187, %s188
      %p192 = pneg %p186
      %p193 = scmp.eq.s32.totalorder %s15, 1
      %p194 = por %p192, %p193
      %p195 = scmp.ne.s32.totalorder %s187, %s190
      %p196 = scmp.eq.s32.totalorder %s15, 0
      %p197 = por %p195, %p196
      %p198 = scmp.ne.s32.totalorder %s187, %s190
      %p199 = scmp.eq.s32.totalorder %s20, 1
      %p200 = por %p198, %p199
      %p201 = scmp.ne.s32.totalorder %s190, %s191
      %p202 = scmp.eq.s32.totalorder %s20, 0
      %p203 = por %p201, %p202
      %p204 = scmp.ne.s32.totalorder %s190, %s191
      %p205 = scmp.eq.s32.totalorder %s21, 1
      %p206 = por %p204, %p205
      %p208 = scmp.ne.s32.totalorder %s191, %s207
      %p209 = scmp.eq.s32.totalorder %s21, 0
      %p210 = por %p208, %p209
      %p211 = scmp.le.s32.totalorder 1, %s15
      %p212 = scmp.lt.s32.totalorder %s15, 3
      %p213 = pnand %p211, %p212
      %p214 = pneg %p213
      // Predicated region
      $region9: #{retentive_attention.3} parent=5 // pred_check
        _
      $region10: #{retentive_attention.3} parent=5 // pred_check_branch
        %216 = sbr.rel (%p213) target = $region12
      $region11: #{retentive_attention.3} parent=5 // pred_region
        %s217 = ssub.s32 %s15, 1
        // Predicated region
        $region13: #{retentive_attention.3} parent=11 // pred_check
          %p218 = pneg %p133
        $region14: #{retentive_attention.3} parent=11 // pred_check_branch
          %220 = sbr.rel (%p218) target = $region16
        $region15: #{retentive_attention.3} parent=11 // pred_region
          %p221 = scmp.lt.s32.totalorder %s25, 0
          %s222 = scalar_select %p221, %s25, 0
          %s223 = smul.addr %s222, 8
          %s224 = scalar_lea.vmem %s3, %s223
        $region16: #{retentive_attention.3} parent=11 // pred_fallthru
          _
        // Predicated region
        $region17: #{retentive_attention.3} parent=11 // pred_check
          %p225 = pneg %p154
        $region18: #{retentive_attention.3} parent=11 // pred_check_branch
          %227 = sbr.rel (%p225) target = $region20
        $region19: #{retentive_attention.3} parent=11 // pred_region
          _
        $region20: #{retentive_attention.3} parent=11 // pred_fallthru
          _
        // Predicated region
        $region21: #{retentive_attention.3} parent=11 // pred_check
          %p228 = pneg %p175
        $region22: #{retentive_attention.3} parent=11 // pred_check_branch
          %230 = sbr.rel (%p228) target = $region24
        $region23: #{retentive_attention.3} parent=11 // pred_region
          _
        $region24: #{retentive_attention.3} parent=11 // pred_fallthru
          _
      $region12: #{retentive_attention.3} parent=5 // pred_fallthru
        _
      %p231 = scmp.lt.s32.totalorder %s15, 2
      // Predicated region
      $region25: #{retentive_attention.3} parent=5 // pred_check
        %p232 = pneg %p231
      $region26: #{retentive_attention.3} parent=5 // pred_check_branch
        %234 = sbr.rel (%p232) target = $region28
      $region27: #{retentive_attention.3} parent=5 // pred_region
        // Predicated region
        $region29: #{retentive_attention.3} parent=27 // pred_check
          %p235 = pneg %p49
        $region30: #{retentive_attention.3} parent=27 // pred_check_branch
          %237 = sbr.rel (%p235) target = $region32
        $region31: #{retentive_attention.3} parent=27 // pred_region
          %p238 = scmp.lt.s32.totalorder %s22, 1
          %s239 = scalar_select %p238, %s22, 1
          %p240 = scmp.lt.s32.totalorder %s23, 0
          %s241 = scalar_select %p240, %s23, 0
          %s242 = sadd.s32 %s241, %s239
          %s243 = smul.addr %s242, 8
          %s244 = scalar_lea.vmem %s0, %s243
        $region32: #{retentive_attention.3} parent=27 // pred_fallthru
          _
        // Predicated region
        $region33: #{retentive_attention.3} parent=27 // pred_check
          %p245 = pneg %p75
        $region34: #{retentive_attention.3} parent=27 // pred_check_branch
          %247 = sbr.rel (%p245) target = $region36
        $region35: #{retentive_attention.3} parent=27 // pred_region
          %p248 = scmp.lt.s32.totalorder %s22, 1
          %s249 = scalar_select %p248, %s22, 1
          %s250 = smul.addr %s249, 8
          %s251 = scalar_lea.vmem %s1, %s250
        $region36: #{retentive_attention.3} parent=27 // pred_fallthru
          _
        // Predicated region
        $region37: #{retentive_attention.3} parent=27 // pred_check
          %p252 = pneg %p101
        $region38: #{retentive_attention.3} parent=27 // pred_check_branch
          %254 = sbr.rel (%p252) target = $region40
        $region39: #{retentive_attention.3} parent=27 // pred_region
          %p255 = scmp.lt.s32.totalorder %s22, 1
          %s256 = scalar_select %p255, %s22, 1
          %s257 = smul.addr %s256, 8
          %s258 = scalar_lea.vmem %s2, %s257
        $region40: #{retentive_attention.3} parent=27 // pred_fallthru
          _
      $region28: #{retentive_attention.3} parent=5 // pred_fallthru
        _
      %p259 = scmp.le.s32.totalorder 1, %s15
      %p260 = scmp.lt.s32.totalorder %s15, 3
      %p261 = pnand %p259, %p260
      %p262 = pneg %p261
      // Predicated region
      $region41: #{retentive_attention.3} parent=5 // pred_check
        _
      $region42: #{retentive_attention.3} parent=5 // pred_check_branch
        %264 = sbr.rel (%p261) target = $region44
      $region43: #{retentive_attention.3} parent=5 // pred_region
        %s265 = ssub.s32 %s15, 1
        %p266 = scmp.lt.s32.totalorder %s24, 1
        %s267 = scalar_select %p266, %s24, 1
        %p268 = scmp.lt.s32.totalorder %s25, 0
        %s269 = scalar_select %p268, %s25, 0
        %s270 = sadd.s32 %s269, %s267
        %s271 = smul.addr %s270, 8
        %s272 = scalar_lea.vmem %s0, %s271
        %p273 = pneg %p55
        %p274 = pneg %p52
        %p275 = scmp.lt.s32.totalorder %s24, 1
        %s276 = scalar_select %p275, %s24, 1
        %s277 = smul.addr %s276, 8
        %s278 = scalar_lea.vmem %s1, %s277
        %p279 = pneg %p81
        %p280 = pneg %p78
        %p281 = scmp.lt.s32.totalorder %s24, 1
        %s282 = scalar_select %p281, %s24, 1
        %s283 = smul.addr %s282, 8
        %s284 = scalar_lea.vmem %s2, %s283
        %p285 = pneg %p107
        %p286 = pneg %p104
        %p287 = scmp.lt.s32.totalorder %s25, 0
        %s288 = scalar_select %p287, %s25, 0
        %s289 = smul.addr %s288, 8
        %s290 = scalar_lea.vmem %s3, %s289
        %p291 = pneg %p133
        %p292 = pneg %p130
        %p293 = pneg %p154
        %p294 = pneg %p151
        %p295 = pneg %p175
        %p296 = pneg %p172
        %p297 = pneg %p203
        %p298 = pneg %p200
        %s299 = sand.u32 %s190, 1
        %s300 = scalar_lea.sflag [#allocation3], %s299
        %s301 = sand.u32 %s190, 1
        %s302 = smul.addr %s301, 8
        %s303 = scalar_lea.vmem [#allocation2], %s302
        %p304 = scmp.lt.s32.totalorder %s24, 1
        %s305 = scalar_select %p304, %s24, 1
        %p306 = scmp.lt.s32.totalorder %s25, 0
        %s307 = scalar_select %p306, %s25, 0
        %s308 = sadd.s32 %s307, %s305
        %s309 = smul.addr %s308, 8
        %s310 = scalar_lea.vmem %s0, %s309
        %p311 = scmp.lt.s32.totalorder %s24, 1
        %s312 = scalar_select %p311, %s24, 1
        %s313 = smul.addr %s312, 8
        %s314 = scalar_lea.vmem %s1, %s313
        %p315 = scmp.lt.s32.totalorder %s24, 1
        %s316 = scalar_select %p315, %s24, 1
        %s317 = smul.addr %s316, 8
        %s318 = scalar_lea.vmem %s2, %s317
        %p319 = scmp.lt.s32.totalorder %s25, 0
        %s320 = scalar_select %p319, %s25, 0
        %s321 = smul.addr %s320, 8
        %s322 = scalar_lea.vmem %s3, %s321
        %v323 = vld [vmem:[%s310] sm:$0xff]
        %v324 = vld [vmem:[%s322] sm:$0xff]
        %v325 = vmul.f32 %v323, %v324
        %v326 = vld [vmem:[%s314] sm:$0xff]
        %v327 = vld [vmem:[%s318] sm:$0xff]
        %v328 = vld [vmem:[%s4] sm:$0xff]
        %v329 = vld [vmem:[%s4 + $0x8] sm:$0xff]
        %v330 = vld [vmem:[%s4 + $0x10] sm:$0xff]
        %v331 = vld [vmem:[%s4 + $0x18] sm:$0xff]
        %s332 = smul.u32 %s25, 8
        %v333 = vlaneseq
        %v334 = vshrl.u32 %v333, 7
        %v335 = vstv %s332
        %v336 = vadd.s32 %v335, %v334
        %v337 = vlaneseq
        %v338 = vand.u32 %v337, 127
        %vm339 = vcmp.ge.s32.totalorder %v336, %v338
        %vm340 = vcmask 64512
        %v342 = vsel %vm340, %v325, 0
        %v345 = vsel %vm340, %v326, 0
        %347 = vmatprep.subr.mxu0 0.0
        %348 = vmatpush1.xpose.msra.mxu0 0.0
        %349 = vmatprep.subr.mxu0 0.0
        %350 = vmatpush1.xpose.msra.mxu0 0.0
        %351 = vmatprep.subr.mxu0 0.0
        %352 = vmatpush1.xpose.msra.mxu0 0.0
        %353 = vmatprep.subr.mxu0 0.0
        %354 = vmatpush1.xpose.msra.mxu0 0.0
        %355 = vmatprep.subr.mxu0 0.0
        %356 = vmatpush1.xpose.msra.mxu0 0.0
        %357 = vmatprep.subr.mxu0 0.0
        %358 = vmatpush1.xpose.msra.mxu0 0.0
        %359 = vmatprep.subr.mxu0 0.0
        %360 = vmatpush1.xpose.msra.mxu0 0.0
        %361 = vmatprep.subr.mxu0 0.0
        %362 = vmatpush1.xpose.msra.mxu0 0.0
        %363 = vmatprep.subr.mxu0 0.0
        %364 = vmatpush1.xpose.msra.mxu0 0.0
        %365 = vmatprep.subr.mxu0 0.0
        %366 = vmatpush1.xpose.msra.mxu0 0.0
        %367 = vmatprep.subr.mxu0 0.0
        %368 = vmatpush1.xpose.msra.mxu0 0.0
        %369 = vmatprep.subr.mxu0 0.0
        %370 = vmatpush1.xpose.msra.mxu0 0.0
        %371 = vmatprep.subr.mxu0 0.0
        %372 = vmatpush1.xpose.msra.mxu0 0.0
        %373 = vmatprep.subr.mxu0 0.0
        %374 = vmatpush1.xpose.msra.mxu0 0.0
        %375 = vmatprep.subr.mxu0 0.0
        %376 = vmatpush1.xpose.msra.mxu0 0.0
        %377 = vmatprep.subr.mxu0 0.0
        %378 = vmatpush1.xpose.msra.mxu0 %v345
        %379 = vmatprep.subr.mxu0 0.0
        %380 = vmatpush2.xpose.msra.mxu0 0.0
        %381 = vmatprep.subr.mxu0 0.0
        %382 = vmatpush2.xpose.msra.mxu0 0.0
        %383 = vmatprep.subr.mxu0 0.0
        %384 = vmatpush2.xpose.msra.mxu0 0.0
        %385 = vmatprep.subr.mxu0 0.0
        %386 = vmatpush2.xpose.msra.mxu0 0.0
        %387 = vmatprep.subr.mxu0 0.0
        %388 = vmatpush2.xpose.msra.mxu0 0.0
        %389 = vmatprep.subr.mxu0 0.0
        %390 = vmatpush2.xpose.msra.mxu0 0.0
        %391 = vmatprep.subr.mxu0 0.0
        %392 = vmatpush2.xpose.msra.mxu0 0.0
        %393 = vmatprep.subr.mxu0 0.0
        %394 = vmatpush2.xpose.msra.mxu0 0.0
        %395 = vmatprep.subr.mxu0 0.0
        %396 = vmatpush2.xpose.msra.mxu0 0.0
        %397 = vmatprep.subr.mxu0 0.0
        %398 = vmatpush2.xpose.msra.mxu0 0.0
        %399 = vmatprep.subr.mxu0 0.0
        %400 = vmatpush2.xpose.msra.mxu0 0.0
        %401 = vmatprep.subr.mxu0 0.0
        %402 = vmatpush2.xpose.msra.mxu0 0.0
        %403 = vmatprep.subr.mxu0 0.0
        %404 = vmatpush2.xpose.msra.mxu0 0.0
        %405 = vmatprep.subr.mxu0 0.0
        %406 = vmatpush2.xpose.msra.mxu0 0.0
        %407 = vmatprep.subr.mxu0 0.0
        %408 = vmatpush2.xpose.msra.mxu0 0.0
        %409 = vmatprep.subr.mxu0 0.0
        %410 = vmatpush2.xpose.msra.mxu0 0.0
        %411 = vmatprep.mubr.f32.mxu0 0.0
        %412 = vmatmul.mubr.f32.gmra.mxu0 %v342
        %v413 = vpop.f32.mrf.mxu0
        %v414 = vadd.f32 0.0, %v413
        %v415 = vpop.f32.mrf.mxu0
        %416 = vdwg.mxu0
        %v417 = vsel %vm339, %v414, 0.0
        %v419 = vsel %vm340, %v417, 0
        %421 = vmatprep.subr.mxu0 0.0
        %422 = vmatpush1.msra.mxu0 0.0
        %423 = vmatprep.subr.mxu0 0.0
        %424 = vmatpush1.msra.mxu0 0.0
        %425 = vmatprep.subr.mxu0 0.0
        %426 = vmatpush1.msra.mxu0 0.0
        %427 = vmatprep.subr.mxu0 0.0
        %428 = vmatpush1.msra.mxu0 0.0
        %429 = vmatprep.subr.mxu0 0.0
        %430 = vmatpush1.msra.mxu0 0.0
        %431 = vmatprep.subr.mxu0 0.0
        %432 = vmatpush1.msra.mxu0 0.0
        %433 = vmatprep.subr.mxu0 0.0
        %434 = vmatpush1.msra.mxu0 0.0
        %435 = vmatprep.subr.mxu0 0.0
        %436 = vmatpush1.msra.mxu0 0.0
        %437 = vmatprep.subr.mxu0 0.0
        %438 = vmatpush1.msra.mxu0 0.0
        %439 = vmatprep.subr.mxu0 0.0
        %440 = vmatpush1.msra.mxu0 0.0
        %441 = vmatprep.subr.mxu0 0.0
        %442 = vmatpush1.msra.mxu0 0.0
        %443 = vmatprep.subr.mxu0 0.0
        %444 = vmatpush1.msra.mxu0 0.0
        %445 = vmatprep.subr.mxu0 0.0
        %446 = vmatpush1.msra.mxu0 0.0
        %447 = vmatprep.subr.mxu0 0.0
        %448 = vmatpush1.msra.mxu0 0.0
        %449 = vmatprep.subr.mxu0 0.0
        %450 = vmatpush1.msra.mxu0 0.0
        %451 = vmatprep.subr.mxu0 0.0
        %452 = vmatpush1.msra.mxu0 %v327
        %453 = vmatprep.subr.mxu0 0.0
        %454 = vmatpush2.msra.mxu0 0.0
        %455 = vmatprep.subr.mxu0 0.0
        %456 = vmatpush2.msra.mxu0 0.0
        %457 = vmatprep.subr.mxu0 0.0
        %458 = vmatpush2.msra.mxu0 0.0
        %459 = vmatprep.subr.mxu0 0.0
        %460 = vmatpush2.msra.mxu0 0.0
        %461 = vmatprep.subr.mxu0 0.0
        %462 = vmatpush2.msra.mxu0 0.0
        %463 = vmatprep.subr.mxu0 0.0
        %464 = vmatpush2.msra.mxu0 0.0
        %465 = vmatprep.subr.mxu0 0.0
        %466 = vmatpush2.msra.mxu0 0.0
        %467 = vmatprep.subr.mxu0 0.0
        %468 = vmatpush2.msra.mxu0 0.0
        %469 = vmatprep.subr.mxu0 0.0
        %470 = vmatpush2.msra.mxu0 0.0
        %471 = vmatprep.subr.mxu0 0.0
        %472 = vmatpush2.msra.mxu0 0.0
        %473 = vmatprep.subr.mxu0 0.0
        %474 = vmatpush2.msra.mxu0 0.0
        %475 = vmatprep.subr.mxu0 0.0
        %476 = vmatpush2.msra.mxu0 0.0
        %477 = vmatprep.subr.mxu0 0.0
        %478 = vmatpush2.msra.mxu0 0.0
        %479 = vmatprep.subr.mxu0 0.0
        %480 = vmatpush2.msra.mxu0 0.0
        %481 = vmatprep.subr.mxu0 0.0
        %482 = vmatpush2.msra.mxu0 0.0
        %483 = vmatprep.subr.mxu0 0.0
        %484 = vmatpush2.msra.mxu0 0.0
        %485 = vmatprep.mubr.f32.mxu0 0.0
        %486 = vmatmul.mubr.f32.gmra.mxu0 %v419
        %v487 = vpop.f32.mrf.mxu0
        %v488 = vadd.f32 0.0, %v487
        %v489 = vpop.f32.mrf.mxu0
        %490 = vdwg.mxu0
        %491 = vrot.lane.b32.xlu0 %v325, 120
        %v492 = vpop.permute.xlu0 %491
        %493 = vrot.lane.b32.xlu0 %v326, 120
        %v494 = vpop.permute.xlu0 %493
        %v495 = vsel %vm340, %v492, 0
        %v497 = vsel %vm340, %v494, 0
        %499 = vmatprep.subr.mxu0 0.0
        %500 = vmatpush1.xpose.msra.mxu0 0.0
        %501 = vmatprep.subr.mxu0 0.0
        %502 = vmatpush1.xpose.msra.mxu0 0.0
        %503 = vmatprep.subr.mxu0 0.0
        %504 = vmatpush1.xpose.msra.mxu0 0.0
        %505 = vmatprep.subr.mxu0 0.0
        %506 = vmatpush1.xpose.msra.mxu0 0.0
        %507 = vmatprep.subr.mxu0 0.0
        %508 = vmatpush1.xpose.msra.mxu0 0.0
        %509 = vmatprep.subr.mxu0 0.0
        %510 = vmatpush1.xpose.msra.mxu0 0.0
        %511 = vmatprep.subr.mxu0 0.0
        %512 = vmatpush1.xpose.msra.mxu0 0.0
        %513 = vmatprep.subr.mxu0 0.0
        %514 = vmatpush1.xpose.msra.mxu0 0.0
        %515 = vmatprep.subr.mxu0 0.0
        %516 = vmatpush1.xpose.msra.mxu0 0.0
        %517 = vmatprep.subr.mxu0 0.0
        %518 = vmatpush1.xpose.msra.mxu0 0.0
        %519 = vmatprep.subr.mxu0 0.0
        %520 = vmatpush1.xpose.msra.mxu0 0.0
        %521 = vmatprep.subr.mxu0 0.0
        %522 = vmatpush1.xpose.msra.mxu0 0.0
        %523 = vmatprep.subr.mxu0 0.0
        %524 = vmatpush1.xpose.msra.mxu0 0.0
        %525 = vmatprep.subr.mxu0 0.0
        %526 = vmatpush1.xpose.msra.mxu0 0.0
        %527 = vmatprep.subr.mxu0 0.0
        %528 = vmatpush1.xpose.msra.mxu0 0.0
        %529 = vmatprep.subr.mxu0 0.0
        %530 = vmatpush1.xpose.msra.mxu0 %v497
        %531 = vmatprep.subr.mxu0 0.0
        %532 = vmatpush2.xpose.msra.mxu0 0.0
        %533 = vmatprep.subr.mxu0 0.0
        %534 = vmatpush2.xpose.msra.mxu0 0.0
        %535 = vmatprep.subr.mxu0 0.0
        %536 = vmatpush2.xpose.msra.mxu0 0.0
        %537 = vmatprep.subr.mxu0 0.0
        %538 = vmatpush2.xpose.msra.mxu0 0.0
        %539 = vmatprep.subr.mxu0 0.0
        %540 = vmatpush2.xpose.msra.mxu0 0.0
        %541 = vmatprep.subr.mxu0 0.0
        %542 = vmatpush2.xpose.msra.mxu0 0.0
        %543 = vmatprep.subr.mxu0 0.0
        %544 = vmatpush2.xpose.msra.mxu0 0.0
        %545 = vmatprep.subr.mxu0 0.0
        %546 = vmatpush2.xpose.msra.mxu0 0.0
        %547 = vmatprep.subr.mxu0 0.0
        %548 = vmatpush2.xpose.msra.mxu0 0.0
        %549 = vmatprep.subr.mxu0 0.0
        %550 = vmatpush2.xpose.msra.mxu0 0.0
        %551 = vmatprep.subr.mxu0 0.0
        %552 = vmatpush2.xpose.msra.mxu0 0.0
        %553 = vmatprep.subr.mxu0 0.0
        %554 = vmatpush2.xpose.msra.mxu0 0.0
        %555 = vmatprep.subr.mxu0 0.0
        %556 = vmatpush2.xpose.msra.mxu0 0.0
        %557 = vmatprep.subr.mxu0 0.0
        %558 = vmatpush2.xpose.msra.mxu0 0.0
        %559 = vmatprep.subr.mxu0 0.0
        %560 = vmatpush2.xpose.msra.mxu0 0.0
        %561 = vmatprep.subr.mxu0 0.0
        %562 = vmatpush2.xpose.msra.mxu0 0.0
        %563 = vmatprep.mubr.f32.mxu0 0.0
        %564 = vmatmul.mubr.f32.gmra.mxu0 %v495
        %v565 = vpop.f32.mrf.mxu0
        %v566 = vadd.f32 0.0, %v565
        %v567 = vpop.f32.mrf.mxu0
        %568 = vdwg.mxu0
        %v569 = vsel %vm339, %v566, 0.0
        %571 = vrot.lane.b32.xlu0 %v327, 120
        %v572 = vpop.permute.xlu0 %571
        %v575 = vsel %vm340, %v569, 0
        %577 = vmatprep.subr.mxu0 0.0
        %578 = vmatpush1.msra.mxu0 0.0
        %579 = vmatprep.subr.mxu0 0.0
        %580 = vmatpush1.msra.mxu0 0.0
        %581 = vmatprep.subr.mxu0 0.0
        %582 = vmatpush1.msra.mxu0 0.0
        %583 = vmatprep.subr.mxu0 0.0
        %584 = vmatpush1.msra.mxu0 0.0
        %585 = vmatprep.subr.mxu0 0.0
        %586 = vmatpush1.msra.mxu0 0.0
        %587 = vmatprep.subr.mxu0 0.0
        %588 = vmatpush1.msra.mxu0 0.0
        %589 = vmatprep.subr.mxu0 0.0
        %590 = vmatpush1.msra.mxu0 0.0
        %591 = vmatprep.subr.mxu0 0.0
        %592 = vmatpush1.msra.mxu0 0.0
        %593 = vmatprep.subr.mxu0 0.0
        %594 = vmatpush1.msra.mxu0 0.0
        %595 = vmatprep.subr.mxu0 0.0
        %596 = vmatpush1.msra.mxu0 0.0
        %597 = vmatprep.subr.mxu0 0.0
        %598 = vmatpush1.msra.mxu0 0.0
        %599 = vmatprep.subr.mxu0 0.0
        %600 = vmatpush1.msra.mxu0 0.0
        %601 = vmatprep.subr.mxu0 0.0
        %602 = vmatpush1.msra.mxu0 0.0
        %603 = vmatprep.subr.mxu0 0.0
        %604 = vmatpush1.msra.mxu0 0.0
        %605 = vmatprep.subr.mxu0 0.0
        %606 = vmatpush1.msra.mxu0 0.0
        %607 = vmatprep.subr.mxu0 0.0
        %608 = vmatpush1.msra.mxu0 %v572
        %609 = vmatprep.subr.mxu0 0.0
        %610 = vmatpush2.msra.mxu0 0.0
        %611 = vmatprep.subr.mxu0 0.0
        %612 = vmatpush2.msra.mxu0 0.0
        %613 = vmatprep.subr.mxu0 0.0
        %614 = vmatpush2.msra.mxu0 0.0
        %615 = vmatprep.subr.mxu0 0.0
        %616 = vmatpush2.msra.mxu0 0.0
        %617 = vmatprep.subr.mxu0 0.0
        %618 = vmatpush2.msra.mxu0 0.0
        %619 = vmatprep.subr.mxu0 0.0
        %620 = vmatpush2.msra.mxu0 0.0
        %621 = vmatprep.subr.mxu0 0.0
        %622 = vmatpush2.msra.mxu0 0.0
        %623 = vmatprep.subr.mxu0 0.0
        %624 = vmatpush2.msra.mxu0 0.0
        %625 = vmatprep.subr.mxu0 0.0
        %626 = vmatpush2.msra.mxu0 0.0
        %627 = vmatprep.subr.mxu0 0.0
        %628 = vmatpush2.msra.mxu0 0.0
        %629 = vmatprep.subr.mxu0 0.0
        %630 = vmatpush2.msra.mxu0 0.0
        %631 = vmatprep.subr.mxu0 0.0
        %632 = vmatpush2.msra.mxu0 0.0
        %633 = vmatprep.subr.mxu0 0.0
        %634 = vmatpush2.msra.mxu0 0.0
        %635 = vmatprep.subr.mxu0 0.0
        %636 = vmatpush2.msra.mxu0 0.0
        %637 = vmatprep.subr.mxu0 0.0
        %638 = vmatpush2.msra.mxu0 0.0
        %639 = vmatprep.subr.mxu0 0.0
        %640 = vmatpush2.msra.mxu0 0.0
        %641 = vmatprep.mubr.f32.mxu0 0.0
        %642 = vmatmul.mubr.f32.gmra.mxu0 %v575
        %v643 = vpop.f32.mrf.mxu0
        %v644 = vadd.f32 0.0, %v643
        %v645 = vpop.f32.mrf.mxu0
        %646 = vdwg.mxu0
        %v648 = vsel %vm340, %v644, 0
        %650 = vmatprep.subr.mxu0 0.0
        %651 = vmatpush1.msra.mxu0 0.0
        %652 = vmatprep.subr.mxu0 0.0
        %653 = vmatpush1.msra.mxu0 0.0
        %654 = vmatprep.subr.mxu0 0.0
        %655 = vmatpush1.msra.mxu0 0.0
        %656 = vmatprep.subr.mxu0 0.0
        %657 = vmatpush1.msra.mxu0 0.0
        %658 = vmatprep.subr.mxu0 0.0
        %659 = vmatpush1.msra.mxu0 0.0
        %660 = vmatprep.subr.mxu0 0.0
        %661 = vmatpush1.msra.mxu0 0.0
        %662 = vmatprep.subr.mxu0 0.0
        %663 = vmatpush1.msra.mxu0 0.0
        %664 = vmatprep.subr.mxu0 0.0
        %665 = vmatpush1.msra.mxu0 0.0
        %666 = vmatprep.subr.mxu0 0.0
        %667 = vmatpush1.msra.mxu0 0.0
        %668 = vmatprep.subr.mxu0 0.0
        %669 = vmatpush1.msra.mxu0 0.0
        %670 = vmatprep.subr.mxu0 0.0
        %671 = vmatpush1.msra.mxu0 0.0
        %672 = vmatprep.subr.mxu0 0.0
        %673 = vmatpush1.msra.mxu0 0.0
        %674 = vmatprep.subr.mxu0 0.0
        %675 = vmatpush1.msra.mxu0 0.0
        %676 = vmatprep.subr.mxu0 0.0
        %677 = vmatpush1.msra.mxu0 0.0
        %678 = vmatprep.subr.mxu0 0.0
        %679 = vmatpush1.msra.mxu0 0.0
        %680 = vmatprep.subr.mxu0 0.0
        %681 = vmatpush1.msra.mxu0 %v329
        %682 = vmatprep.subr.mxu0 0.0
        %683 = vmatpush2.msra.mxu0 0.0
        %684 = vmatprep.subr.mxu0 0.0
        %685 = vmatpush2.msra.mxu0 0.0
        %686 = vmatprep.subr.mxu0 0.0
        %687 = vmatpush2.msra.mxu0 0.0
        %688 = vmatprep.subr.mxu0 0.0
        %689 = vmatpush2.msra.mxu0 0.0
        %690 = vmatprep.subr.mxu0 0.0
        %691 = vmatpush2.msra.mxu0 0.0
        %692 = vmatprep.subr.mxu0 0.0
        %693 = vmatpush2.msra.mxu0 0.0
        %694 = vmatprep.subr.mxu0 0.0
        %695 = vmatpush2.msra.mxu0 0.0
        %696 = vmatprep.subr.mxu0 0.0
        %697 = vmatpush2.msra.mxu0 0.0
        %698 = vmatprep.subr.mxu0 0.0
        %699 = vmatpush2.msra.mxu0 0.0
        %700 = vmatprep.subr.mxu0 0.0
        %701 = vmatpush2.msra.mxu0 0.0
        %702 = vmatprep.subr.mxu0 0.0
        %703 = vmatpush2.msra.mxu0 0.0
        %704 = vmatprep.subr.mxu0 0.0
        %705 = vmatpush2.msra.mxu0 0.0
        %706 = vmatprep.subr.mxu0 0.0
        %707 = vmatpush2.msra.mxu0 0.0
        %708 = vmatprep.subr.mxu0 0.0
        %709 = vmatpush2.msra.mxu0 0.0
        %710 = vmatprep.subr.mxu0 0.0
        %711 = vmatpush2.msra.mxu0 0.0
        %712 = vmatprep.subr.mxu0 0.0
        %713 = vmatpush2.msra.mxu0 0.0
        %714 = vmatprep.mubr.f32.mxu0 0.0
        %715 = vmatmul.mubr.f32.gmra.mxu0 %v648
        %v716 = vpop.f32.mrf.mxu0
        %v717 = vadd.f32 0.0, %v716
        %v718 = vpop.f32.mrf.mxu0
        %719 = vdwg.mxu0
        %v721 = vsel %vm340, %v488, 0
        %723 = vmatprep.subr.mxu0 0.0
        %724 = vmatpush1.msra.mxu0 0.0
        %725 = vmatprep.subr.mxu0 0.0
        %726 = vmatpush1.msra.mxu0 0.0
        %727 = vmatprep.subr.mxu0 0.0
        %728 = vmatpush1.msra.mxu0 0.0
        %729 = vmatprep.subr.mxu0 0.0
        %730 = vmatpush1.msra.mxu0 0.0
        %731 = vmatprep.subr.mxu0 0.0
        %732 = vmatpush1.msra.mxu0 0.0
        %733 = vmatprep.subr.mxu0 0.0
        %734 = vmatpush1.msra.mxu0 0.0
        %735 = vmatprep.subr.mxu0 0.0
        %736 = vmatpush1.msra.mxu0 0.0
        %737 = vmatprep.subr.mxu0 0.0
        %738 = vmatpush1.msra.mxu0 0.0
        %739 = vmatprep.subr.mxu0 0.0
        %740 = vmatpush1.msra.mxu0 0.0
        %741 = vmatprep.subr.mxu0 0.0
        %742 = vmatpush1.msra.mxu0 0.0
        %743 = vmatprep.subr.mxu0 0.0
        %744 = vmatpush1.msra.mxu0 0.0
        %745 = vmatprep.subr.mxu0 0.0
        %746 = vmatpush1.msra.mxu0 0.0
        %747 = vmatprep.subr.mxu0 0.0
        %748 = vmatpush1.msra.mxu0 0.0
        %749 = vmatprep.subr.mxu0 0.0
        %750 = vmatpush1.msra.mxu0 0.0
        %751 = vmatprep.subr.mxu0 0.0
        %752 = vmatpush1.msra.mxu0 0.0
        %753 = vmatprep.subr.mxu0 0.0
        %754 = vmatpush1.msra.mxu0 %v328
        %755 = vmatprep.subr.mxu0 0.0
        %756 = vmatpush2.msra.mxu0 0.0
        %757 = vmatprep.subr.mxu0 0.0
        %758 = vmatpush2.msra.mxu0 0.0
        %759 = vmatprep.subr.mxu0 0.0
        %760 = vmatpush2.msra.mxu0 0.0
        %761 = vmatprep.subr.mxu0 0.0
        %762 = vmatpush2.msra.mxu0 0.0
        %763 = vmatprep.subr.mxu0 0.0
        %764 = vmatpush2.msra.mxu0 0.0
        %765 = vmatprep.subr.mxu0 0.0
        %766 = vmatpush2.msra.mxu0 0.0
        %767 = vmatprep.subr.mxu0 0.0
        %768 = vmatpush2.msra.mxu0 0.0
        %769 = vmatprep.subr.mxu0 0.0
        %770 = vmatpush2.msra.mxu0 0.0
        %771 = vmatprep.subr.mxu0 0.0
        %772 = vmatpush2.msra.mxu0 0.0
        %773 = vmatprep.subr.mxu0 0.0
        %774 = vmatpush2.msra.mxu0 0.0
        %775 = vmatprep.subr.mxu0 0.0
        %776 = vmatpush2.msra.mxu0 0.0
        %777 = vmatprep.subr.mxu0 0.0
        %778 = vmatpush2.msra.mxu0 0.0
        %779 = vmatprep.subr.mxu0 0.0
        %780 = vmatpush2.msra.mxu0 0.0
        %781 = vmatprep.subr.mxu0 0.0
        %782 = vmatpush2.msra.mxu0 0.0
        %783 = vmatprep.subr.mxu0 0.0
        %784 = vmatpush2.msra.mxu0 0.0
        %785 = vmatprep.subr.mxu0 0.0
        %786 = vmatpush2.msra.mxu0 0.0
        %787 = vmatprep.mubr.f32.mxu0 0.0
        %788 = vmatmul.mubr.f32.gmra.mxu0 %v721
        %v789 = vpop.f32.mrf.mxu0
        %v790 = vadd.f32 %v717, %v789
        %v791 = vpop.f32.mrf.mxu0
        %792 = vdwg.mxu0
        %793 = vrot.lane.b32.xlu0 %v325, 112
        %v794 = vpop.permute.xlu0 %793
        %795 = vrot.lane.b32.xlu0 %v326, 112
        %v796 = vpop.permute.xlu0 %795
        %v797 = vsel %vm340, %v794, 0
        %v799 = vsel %vm340, %v796, 0
        %801 = vmatprep.subr.mxu0 0.0
        %802 = vmatpush1.xpose.msra.mxu0 0.0
        %803 = vmatprep.subr.mxu0 0.0
        %804 = vmatpush1.xpose.msra.mxu0 0.0
        %805 = vmatprep.subr.mxu0 0.0
        %806 = vmatpush1.xpose.msra.mxu0 0.0
        %807 = vmatprep.subr.mxu0 0.0
        %808 = vmatpush1.xpose.msra.mxu0 0.0
        %809 = vmatprep.subr.mxu0 0.0
        %810 = vmatpush1.xpose.msra.mxu0 0.0
        %811 = vmatprep.subr.mxu0 0.0
        %812 = vmatpush1.xpose.msra.mxu0 0.0
        %813 = vmatprep.subr.mxu0 0.0
        %814 = vmatpush1.xpose.msra.mxu0 0.0
        %815 = vmatprep.subr.mxu0 0.0
        %816 = vmatpush1.xpose.msra.mxu0 0.0
        %817 = vmatprep.subr.mxu0 0.0
        %818 = vmatpush1.xpose.msra.mxu0 0.0
        %819 = vmatprep.subr.mxu0 0.0
        %820 = vmatpush1.xpose.msra.mxu0 0.0
        %821 = vmatprep.subr.mxu0 0.0
        %822 = vmatpush1.xpose.msra.mxu0 0.0
        %823 = vmatprep.subr.mxu0 0.0
        %824 = vmatpush1.xpose.msra.mxu0 0.0
        %825 = vmatprep.subr.mxu0 0.0
        %826 = vmatpush1.xpose.msra.mxu0 0.0
        %827 = vmatprep.subr.mxu0 0.0
        %828 = vmatpush1.xpose.msra.mxu0 0.0
        %829 = vmatprep.subr.mxu0 0.0
        %830 = vmatpush1.xpose.msra.mxu0 0.0
        %831 = vmatprep.subr.mxu0 0.0
        %832 = vmatpush1.xpose.msra.mxu0 %v799
        %833 = vmatprep.subr.mxu0 0.0
        %834 = vmatpush2.xpose.msra.mxu0 0.0
        %835 = vmatprep.subr.mxu0 0.0
        %836 = vmatpush2.xpose.msra.mxu0 0.0
        %837 = vmatprep.subr.mxu0 0.0
        %838 = vmatpush2.xpose.msra.mxu0 0.0
        %839 = vmatprep.subr.mxu0 0.0
        %840 = vmatpush2.xpose.msra.mxu0 0.0
        %841 = vmatprep.subr.mxu0 0.0
        %842 = vmatpush2.xpose.msra.mxu0 0.0
        %843 = vmatprep.subr.mxu0 0.0
        %844 = vmatpush2.xpose.msra.mxu0 0.0
        %845 = vmatprep.subr.mxu0 0.0
        %846 = vmatpush2.xpose.msra.mxu0 0.0
        %847 = vmatprep.subr.mxu0 0.0
        %848 = vmatpush2.xpose.msra.mxu0 0.0
        %849 = vmatprep.subr.mxu0 0.0
        %850 = vmatpush2.xpose.msra.mxu0 0.0
        %851 = vmatprep.subr.mxu0 0.0
        %852 = vmatpush2.xpose.msra.mxu0 0.0
        %853 = vmatprep.subr.mxu0 0.0
        %854 = vmatpush2.xpose.msra.mxu0 0.0
        %855 = vmatprep.subr.mxu0 0.0
        %856 = vmatpush2.xpose.msra.mxu0 0.0
        %857 = vmatprep.subr.mxu0 0.0
        %858 = vmatpush2.xpose.msra.mxu0 0.0
        %859 = vmatprep.subr.mxu0 0.0
        %860 = vmatpush2.xpose.msra.mxu0 0.0
        %861 = vmatprep.subr.mxu0 0.0
        %862 = vmatpush2.xpose.msra.mxu0 0.0
        %863 = vmatprep.subr.mxu0 0.0
        %864 = vmatpush2.xpose.msra.mxu0 0.0
        %865 = vmatprep.mubr.f32.mxu0 0.0
        %866 = vmatmul.mubr.f32.gmra.mxu0 %v797
        %v867 = vpop.f32.mrf.mxu0
        %v868 = vadd.f32 0.0, %v867
        %v869 = vpop.f32.mrf.mxu0
        %870 = vdwg.mxu0
        %v871 = vsel %vm339, %v868, 0.0
        %872 = vrot.lane.b32.xlu0 %v327, 112
        %v873 = vpop.permute.xlu0 %872
        %v876 = vsel %vm340, %v871, 0
        %878 = vmatprep.subr.mxu0 0.0
        %879 = vmatpush1.msra.mxu0 0.0
        %880 = vmatprep.subr.mxu0 0.0
        %881 = vmatpush1.msra.mxu0 0.0
        %882 = vmatprep.subr.mxu0 0.0
        %883 = vmatpush1.msra.mxu0 0.0
        %884 = vmatprep.subr.mxu0 0.0
        %885 = vmatpush1.msra.mxu0 0.0
        %886 = vmatprep.subr.mxu0 0.0
        %887 = vmatpush1.msra.mxu0 0.0
        %888 = vmatprep.subr.mxu0 0.0
        %889 = vmatpush1.msra.mxu0 0.0
        %890 = vmatprep.subr.mxu0 0.0
        %891 = vmatpush1.msra.mxu0 0.0
        %892 = vmatprep.subr.mxu0 0.0
        %893 = vmatpush1.msra.mxu0 0.0
        %894 = vmatprep.subr.mxu0 0.0
        %895 = vmatpush1.msra.mxu0 0.0
        %896 = vmatprep.subr.mxu0 0.0
        %897 = vmatpush1.msra.mxu0 0.0
        %898 = vmatprep.subr.mxu0 0.0
        %899 = vmatpush1.msra.mxu0 0.0
        %900 = vmatprep.subr.mxu0 0.0
        %901 = vmatpush1.msra.mxu0 0.0
        %902 = vmatprep.subr.mxu0 0.0
        %903 = vmatpush1.msra.mxu0 0.0
        %904 = vmatprep.subr.mxu0 0.0
        %905 = vmatpush1.msra.mxu0 0.0
        %906 = vmatprep.subr.mxu0 0.0
        %907 = vmatpush1.msra.mxu0 0.0
        %908 = vmatprep.subr.mxu0 0.0
        %909 = vmatpush1.msra.mxu0 %v873
        %910 = vmatprep.subr.mxu0 0.0
        %911 = vmatpush2.msra.mxu0 0.0
        %912 = vmatprep.subr.mxu0 0.0
        %913 = vmatpush2.msra.mxu0 0.0
        %914 = vmatprep.subr.mxu0 0.0
        %915 = vmatpush2.msra.mxu0 0.0
        %916 = vmatprep.subr.mxu0 0.0
        %917 = vmatpush2.msra.mxu0 0.0
        %918 = vmatprep.subr.mxu0 0.0
        %919 = vmatpush2.msra.mxu0 0.0
        %920 = vmatprep.subr.mxu0 0.0
        %921 = vmatpush2.msra.mxu0 0.0
        %922 = vmatprep.subr.mxu0 0.0
        %923 = vmatpush2.msra.mxu0 0.0
        %924 = vmatprep.subr.mxu0 0.0
        %925 = vmatpush2.msra.mxu0 0.0
        %926 = vmatprep.subr.mxu0 0.0
        %927 = vmatpush2.msra.mxu0 0.0
        %928 = vmatprep.subr.mxu0 0.0
        %929 = vmatpush2.msra.mxu0 0.0
        %930 = vmatprep.subr.mxu0 0.0
        %931 = vmatpush2.msra.mxu0 0.0
        %932 = vmatprep.subr.mxu0 0.0
        %933 = vmatpush2.msra.mxu0 0.0
        %934 = vmatprep.subr.mxu0 0.0
        %935 = vmatpush2.msra.mxu0 0.0
        %936 = vmatprep.subr.mxu0 0.0
        %937 = vmatpush2.msra.mxu0 0.0
        %938 = vmatprep.subr.mxu0 0.0
        %939 = vmatpush2.msra.mxu0 0.0
        %940 = vmatprep.subr.mxu0 0.0
        %941 = vmatpush2.msra.mxu0 0.0
        %942 = vmatprep.mubr.f32.mxu0 0.0
        %943 = vmatmul.mubr.f32.gmra.mxu0 %v876
        %v944 = vpop.f32.mrf.mxu0
        %v945 = vadd.f32 0.0, %v944
        %v946 = vpop.f32.mrf.mxu0
        %947 = vdwg.mxu0
        %v949 = vsel %vm340, %v945, 0
        %951 = vmatprep.subr.mxu0 0.0
        %952 = vmatpush1.msra.mxu0 0.0
        %953 = vmatprep.subr.mxu0 0.0
        %954 = vmatpush1.msra.mxu0 0.0
        %955 = vmatprep.subr.mxu0 0.0
        %956 = vmatpush1.msra.mxu0 0.0
        %957 = vmatprep.subr.mxu0 0.0
        %958 = vmatpush1.msra.mxu0 0.0
        %959 = vmatprep.subr.mxu0 0.0
        %960 = vmatpush1.msra.mxu0 0.0
        %961 = vmatprep.subr.mxu0 0.0
        %962 = vmatpush1.msra.mxu0 0.0
        %963 = vmatprep.subr.mxu0 0.0
        %964 = vmatpush1.msra.mxu0 0.0
        %965 = vmatprep.subr.mxu0 0.0
        %966 = vmatpush1.msra.mxu0 0.0
        %967 = vmatprep.subr.mxu0 0.0
        %968 = vmatpush1.msra.mxu0 0.0
        %969 = vmatprep.subr.mxu0 0.0
        %970 = vmatpush1.msra.mxu0 0.0
        %971 = vmatprep.subr.mxu0 0.0
        %972 = vmatpush1.msra.mxu0 0.0
        %973 = vmatprep.subr.mxu0 0.0
        %974 = vmatpush1.msra.mxu0 0.0
        %975 = vmatprep.subr.mxu0 0.0
        %976 = vmatpush1.msra.mxu0 0.0
        %977 = vmatprep.subr.mxu0 0.0
        %978 = vmatpush1.msra.mxu0 0.0
        %979 = vmatprep.subr.mxu0 0.0
        %980 = vmatpush1.msra.mxu0 0.0
        %981 = vmatprep.subr.mxu0 0.0
        %982 = vmatpush1.msra.mxu0 %v330
        %983 = vmatprep.subr.mxu0 0.0
        %984 = vmatpush2.msra.mxu0 0.0
        %985 = vmatprep.subr.mxu0 0.0
        %986 = vmatpush2.msra.mxu0 0.0
        %987 = vmatprep.subr.mxu0 0.0
        %988 = vmatpush2.msra.mxu0 0.0
        %989 = vmatprep.subr.mxu0 0.0
        %990 = vmatpush2.msra.mxu0 0.0
        %991 = vmatprep.subr.mxu0 0.0
        %992 = vmatpush2.msra.mxu0 0.0
        %993 = vmatprep.subr.mxu0 0.0
        %994 = vmatpush2.msra.mxu0 0.0
        %995 = vmatprep.subr.mxu0 0.0
        %996 = vmatpush2.msra.mxu0 0.0
        %997 = vmatprep.subr.mxu0 0.0
        %998 = vmatpush2.msra.mxu0 0.0
        %999 = vmatprep.subr.mxu0 0.0
        %1000 = vmatpush2.msra.mxu0 0.0
        %1001 = vmatprep.subr.mxu0 0.0
        %1002 = vmatpush2.msra.mxu0 0.0
        %1003 = vmatprep.subr.mxu0 0.0
        %1004 = vmatpush2.msra.mxu0 0.0
        %1005 = vmatprep.subr.mxu0 0.0
        %1006 = vmatpush2.msra.mxu0 0.0
        %1007 = vmatprep.subr.mxu0 0.0
        %1008 = vmatpush2.msra.mxu0 0.0
        %1009 = vmatprep.subr.mxu0 0.0
        %1010 = vmatpush2.msra.mxu0 0.0
        %1011 = vmatprep.subr.mxu0 0.0
        %1012 = vmatpush2.msra.mxu0 0.0
        %1013 = vmatprep.subr.mxu0 0.0
        %1014 = vmatpush2.msra.mxu0 0.0
        %1015 = vmatprep.mubr.f32.mxu0 0.0
        %1016 = vmatmul.mubr.f32.gmra.mxu0 %v949
        %v1017 = vpop.f32.mrf.mxu0
        %v1018 = vadd.f32 0.0, %v1017
        %v1019 = vpop.f32.mrf.mxu0
        %1020 = vdwg.mxu0
        %v1021 = vadd.f32 %v790, %v1018
        %1022 = vrot.lane.b32.xlu0 %v325, 104
        %v1023 = vpop.permute.xlu0 %1022
        %1024 = vrot.lane.b32.xlu0 %v326, 104
        %v1025 = vpop.permute.xlu0 %1024
        %v1026 = vsel %vm340, %v1023, 0
        %v1028 = vsel %vm340, %v1025, 0
        %1030 = vmatprep.subr.mxu0 0.0
        %1031 = vmatpush1.xpose.msra.mxu0 0.0
        %1032 = vmatprep.subr.mxu0 0.0
        %1033 = vmatpush1.xpose.msra.mxu0 0.0
        %1034 = vmatprep.subr.mxu0 0.0
        %1035 = vmatpush1.xpose.msra.mxu0 0.0
        %1036 = vmatprep.subr.mxu0 0.0
        %1037 = vmatpush1.xpose.msra.mxu0 0.0
        %1038 = vmatprep.subr.mxu0 0.0
        %1039 = vmatpush1.xpose.msra.mxu0 0.0
        %1040 = vmatprep.subr.mxu0 0.0
        %1041 = vmatpush1.xpose.msra.mxu0 0.0
        %1042 = vmatprep.subr.mxu0 0.0
        %1043 = vmatpush1.xpose.msra.mxu0 0.0
        %1044 = vmatprep.subr.mxu0 0.0
        %1045 = vmatpush1.xpose.msra.mxu0 0.0
        %1046 = vmatprep.subr.mxu0 0.0
        %1047 = vmatpush1.xpose.msra.mxu0 0.0
        %1048 = vmatprep.subr.mxu0 0.0
        %1049 = vmatpush1.xpose.msra.mxu0 0.0
        %1050 = vmatprep.subr.mxu0 0.0
        %1051 = vmatpush1.xpose.msra.mxu0 0.0
        %1052 = vmatprep.subr.mxu0 0.0
        %1053 = vmatpush1.xpose.msra.mxu0 0.0
        %1054 = vmatprep.subr.mxu0 0.0
        %1055 = vmatpush1.xpose.msra.mxu0 0.0
        %1056 = vmatprep.subr.mxu0 0.0
        %1057 = vmatpush1.xpose.msra.mxu0 0.0
        %1058 = vmatprep.subr.mxu0 0.0
        %1059 = vmatpush1.xpose.msra.mxu0 0.0
        %1060 = vmatprep.subr.mxu0 0.0
        %1061 = vmatpush1.xpose.msra.mxu0 %v1028
        %1062 = vmatprep.subr.mxu0 0.0
        %1063 = vmatpush2.xpose.msra.mxu0 0.0
        %1064 = vmatprep.subr.mxu0 0.0
        %1065 = vmatpush2.xpose.msra.mxu0 0.0
        %1066 = vmatprep.subr.mxu0 0.0
        %1067 = vmatpush2.xpose.msra.mxu0 0.0
        %1068 = vmatprep.subr.mxu0 0.0
        %1069 = vmatpush2.xpose.msra.mxu0 0.0
        %1070 = vmatprep.subr.mxu0 0.0
        %1071 = vmatpush2.xpose.msra.mxu0 0.0
        %1072 = vmatprep.subr.mxu0 0.0
        %1073 = vmatpush2.xpose.msra.mxu0 0.0
        %1074 = vmatprep.subr.mxu0 0.0
        %1075 = vmatpush2.xpose.msra.mxu0 0.0
        %1076 = vmatprep.subr.mxu0 0.0
        %1077 = vmatpush2.xpose.msra.mxu0 0.0
        %1078 = vmatprep.subr.mxu0 0.0
        %1079 = vmatpush2.xpose.msra.mxu0 0.0
        %1080 = vmatprep.subr.mxu0 0.0
        %1081 = vmatpush2.xpose.msra.mxu0 0.0
        %1082 = vmatprep.subr.mxu0 0.0
        %1083 = vmatpush2.xpose.msra.mxu0 0.0
        %1084 = vmatprep.subr.mxu0 0.0
        %1085 = vmatpush2.xpose.msra.mxu0 0.0
        %1086 = vmatprep.subr.mxu0 0.0
        %1087 = vmatpush2.xpose.msra.mxu0 0.0
        %1088 = vmatprep.subr.mxu0 0.0
        %1089 = vmatpush2.xpose.msra.mxu0 0.0
        %1090 = vmatprep.subr.mxu0 0.0
        %1091 = vmatpush2.xpose.msra.mxu0 0.0
        %1092 = vmatprep.subr.mxu0 0.0
        %1093 = vmatpush2.xpose.msra.mxu0 0.0
        %1094 = vmatprep.mubr.f32.mxu0 0.0
        %1095 = vmatmul.mubr.f32.gmra.mxu0 %v1026
        %v1096 = vpop.f32.mrf.mxu0
        %v1097 = vadd.f32 0.0, %v1096
        %v1098 = vpop.f32.mrf.mxu0
        %1099 = vdwg.mxu0
        %v1100 = vsel %vm339, %v1097, 0.0
        %1101 = vrot.lane.b32.xlu0 %v327, 104
        %v1102 = vpop.permute.xlu0 %1101
        %v1105 = vsel %vm340, %v1100, 0
        %1107 = vmatprep.subr.mxu0 0.0
        %1108 = vmatpush1.msra.mxu0 0.0
        %1109 = vmatprep.subr.mxu0 0.0
        %1110 = vmatpush1.msra.mxu0 0.0
        %1111 = vmatprep.subr.mxu0 0.0
        %1112 = vmatpush1.msra.mxu0 0.0
        %1113 = vmatprep.subr.mxu0 0.0
        %1114 = vmatpush1.msra.mxu0 0.0
        %1115 = vmatprep.subr.mxu0 0.0
        %1116 = vmatpush1.msra.mxu0 0.0
        %1117 = vmatprep.subr.mxu0 0.0
        %1118 = vmatpush1.msra.mxu0 0.0
        %1119 = vmatprep.subr.mxu0 0.0
        %1120 = vmatpush1.msra.mxu0 0.0
        %1121 = vmatprep.subr.mxu0 0.0
        %1122 = vmatpush1.msra.mxu0 0.0
        %1123 = vmatprep.subr.mxu0 0.0
        %1124 = vmatpush1.msra.mxu0 0.0
        %1125 = vmatprep.subr.mxu0 0.0
        %1126 = vmatpush1.msra.mxu0 0.0
        %1127 = vmatprep.subr.mxu0 0.0
        %1128 = vmatpush1.msra.mxu0 0.0
        %1129 = vmatprep.subr.mxu0 0.0
        %1130 = vmatpush1.msra.mxu0 0.0
        %1131 = vmatprep.subr.mxu0 0.0
        %1132 = vmatpush1.msra.mxu0 0.0
        %1133 = vmatprep.subr.mxu0 0.0
        %1134 = vmatpush1.msra.mxu0 0.0
        %1135 = vmatprep.subr.mxu0 0.0
        %1136 = vmatpush1.msra.mxu0 0.0
        %1137 = vmatprep.subr.mxu0 0.0
        %1138 = vmatpush1.msra.mxu0 %v1102
        %1139 = vmatprep.subr.mxu0 0.0
        %1140 = vmatpush2.msra.mxu0 0.0
        %1141 = vmatprep.subr.mxu0 0.0
        %1142 = vmatpush2.msra.mxu0 0.0
        %1143 = vmatprep.subr.mxu0 0.0
        %1144 = vmatpush2.msra.mxu0 0.0
        %1145 = vmatprep.subr.mxu0 0.0
        %1146 = vmatpush2.msra.mxu0 0.0
        %1147 = vmatprep.subr.mxu0 0.0
        %1148 = vmatpush2.msra.mxu0 0.0
        %1149 = vmatprep.subr.mxu0 0.0
        %1150 = vmatpush2.msra.mxu0 0.0
        %1151 = vmatprep.subr.mxu0 0.0
        %1152 = vmatpush2.msra.mxu0 0.0
        %1153 = vmatprep.subr.mxu0 0.0
        %1154 = vmatpush2.msra.mxu0 0.0
        %1155 = vmatprep.subr.mxu0 0.0
        %1156 = vmatpush2.msra.mxu0 0.0
        %1157 = vmatprep.subr.mxu0 0.0
        %1158 = vmatpush2.msra.mxu0 0.0
        %1159 = vmatprep.subr.mxu0 0.0
        %1160 = vmatpush2.msra.mxu0 0.0
        %1161 = vmatprep.subr.mxu0 0.0
        %1162 = vmatpush2.msra.mxu0 0.0
        %1163 = vmatprep.subr.mxu0 0.0
        %1164 = vmatpush2.msra.mxu0 0.0
        %1165 = vmatprep.subr.mxu0 0.0
        %1166 = vmatpush2.msra.mxu0 0.0
        %1167 = vmatprep.subr.mxu0 0.0
        %1168 = vmatpush2.msra.mxu0 0.0
        %1169 = vmatprep.subr.mxu0 0.0
        %1170 = vmatpush2.msra.mxu0 0.0
        %1171 = vmatprep.mubr.f32.mxu0 0.0
        %1172 = vmatmul.mubr.f32.gmra.mxu0 %v1105
        %v1173 = vpop.f32.mrf.mxu0
        %v1174 = vadd.f32 0.0, %v1173
        %v1175 = vpop.f32.mrf.mxu0
        %1176 = vdwg.mxu0
        %v1178 = vsel %vm340, %v1174, 0
        %1180 = vmatprep.subr.mxu0 0.0
        %1181 = vmatpush1.msra.mxu0 0.0
        %1182 = vmatprep.subr.mxu0 0.0
        %1183 = vmatpush1.msra.mxu0 0.0
        %1184 = vmatprep.subr.mxu0 0.0
        %1185 = vmatpush1.msra.mxu0 0.0
        %1186 = vmatprep.subr.mxu0 0.0
        %1187 = vmatpush1.msra.mxu0 0.0
        %1188 = vmatprep.subr.mxu0 0.0
        %1189 = vmatpush1.msra.mxu0 0.0
        %1190 = vmatprep.subr.mxu0 0.0
        %1191 = vmatpush1.msra.mxu0 0.0
        %1192 = vmatprep.subr.mxu0 0.0
        %1193 = vmatpush1.msra.mxu0 0.0
        %1194 = vmatprep.subr.mxu0 0.0
        %1195 = vmatpush1.msra.mxu0 0.0
        %1196 = vmatprep.subr.mxu0 0.0
        %1197 = vmatpush1.msra.mxu0 0.0
        %1198 = vmatprep.subr.mxu0 0.0
        %1199 = vmatpush1.msra.mxu0 0.0
        %1200 = vmatprep.subr.mxu0 0.0
        %1201 = vmatpush1.msra.mxu0 0.0
        %1202 = vmatprep.subr.mxu0 0.0
        %1203 = vmatpush1.msra.mxu0 0.0
        %1204 = vmatprep.subr.mxu0 0.0
        %1205 = vmatpush1.msra.mxu0 0.0
        %1206 = vmatprep.subr.mxu0 0.0
        %1207 = vmatpush1.msra.mxu0 0.0
        %1208 = vmatprep.subr.mxu0 0.0
        %1209 = vmatpush1.msra.mxu0 0.0
        %1210 = vmatprep.subr.mxu0 0.0
        %1211 = vmatpush1.msra.mxu0 %v331
        %1212 = vmatprep.subr.mxu0 0.0
        %1213 = vmatpush2.msra.mxu0 0.0
        %1214 = vmatprep.subr.mxu0 0.0
        %1215 = vmatpush2.msra.mxu0 0.0
        %1216 = vmatprep.subr.mxu0 0.0
        %1217 = vmatpush2.msra.mxu0 0.0
        %1218 = vmatprep.subr.mxu0 0.0
        %1219 = vmatpush2.msra.mxu0 0.0
        %1220 = vmatprep.subr.mxu0 0.0
        %1221 = vmatpush2.msra.mxu0 0.0
        %1222 = vmatprep.subr.mxu0 0.0
        %1223 = vmatpush2.msra.mxu0 0.0
        %1224 = vmatprep.subr.mxu0 0.0
        %1225 = vmatpush2.msra.mxu0 0.0
        %1226 = vmatprep.subr.mxu0 0.0
        %1227 = vmatpush2.msra.mxu0 0.0
        %1228 = vmatprep.subr.mxu0 0.0
        %1229 = vmatpush2.msra.mxu0 0.0
        %1230 = vmatprep.subr.mxu0 0.0
        %1231 = vmatpush2.msra.mxu0 0.0
        %1232 = vmatprep.subr.mxu0 0.0
        %1233 = vmatpush2.msra.mxu0 0.0
        %1234 = vmatprep.subr.mxu0 0.0
        %1235 = vmatpush2.msra.mxu0 0.0
        %1236 = vmatprep.subr.mxu0 0.0
        %1237 = vmatpush2.msra.mxu0 0.0
        %1238 = vmatprep.subr.mxu0 0.0
        %1239 = vmatpush2.msra.mxu0 0.0
        %1240 = vmatprep.subr.mxu0 0.0
        %1241 = vmatpush2.msra.mxu0 0.0
        %1242 = vmatprep.subr.mxu0 0.0
        %1243 = vmatpush2.msra.mxu0 0.0
        %1244 = vmatprep.mubr.f32.mxu0 0.0
        %1245 = vmatmul.mubr.f32.gmra.mxu0 %v1178
        %v1246 = vpop.f32.mrf.mxu0
        %v1247 = vadd.f32 0.0, %v1246
        %v1248 = vpop.f32.mrf.mxu0
        %1249 = vdwg.mxu0
        %v1250 = vadd.f32 %v1021, %v1247
        %v1251 = vld [vmem:[%s5] sm:$0x1]
        %v1253 = vlaneseq
        %v1254 = vshrl.u32 %v1253, 7
        %v1255 = vsub.s32 0, %v1254
        %v1256 = vrot.slane %v1251, %v1255
        %v1258 = vadd.f32 %v1250, %v1256
        %vm1259 = vcmask 261120
        %1260 = vst.msk [vmem:[%s303] sm:$0xff] %vm1259, %v1258
        %s1261 = sand.u32 %s190, 1
        %s1262 = scalar_lea.sflag [#allocation3], %s1261
        %s1263 = sand.u32 %s190, 1
        %s1264 = smul.addr %s1263, 8
        %s1265 = scalar_lea.vmem [#allocation2], %s1264
        // Predicated region
        $region45: #{retentive_attention.3} parent=43 // pred_check
          %p1266 = pneg %p200
        $region46: #{retentive_attention.3} parent=43 // pred_check_branch
          %1268 = sbr.rel (%p1266) target = $region48
        $region47: #{retentive_attention.3} parent=43 // pred_region
          %s1270 = ssub.s32 128, 128
          %1271 = vsyncadd %s1262, %s1270
          %s1272 = sadd.s32 %s25, %s24
          %s1273 = smul.addr %s1272, 128
          %s1274 = scalar_lea.hbm %s6, %s1273
          %s1276 = sshll.u32 %s1265, 4
          %s1277 = int_to_ptr.vmem [resolvable:$true] %s1276
          %1279 = dma.vmem_to_hbm [thread:$0]  %s1277, 128, %s1274, %s1262
        $region48: #{retentive_attention.3} parent=43 // pred_fallthru
          _
      $region44: #{retentive_attention.3} parent=5 // pred_fallthru
        _
      %p1280 = scmp.le.s32.totalorder 2, %s15
      // Predicated region
      $region49: #{retentive_attention.3} parent=5 // pred_check
        %p1281 = pneg %p1280
      $region50: #{retentive_attention.3} parent=5 // pred_check_branch
        %1283 = sbr.rel (%p1281) target = $region52
      $region51: #{retentive_attention.3} parent=5 // pred_region
        %s1284 = ssub.s32 %s15, 2
        // Predicated region
        $region53: #{retentive_attention.3} parent=51 // pred_check
          %p1285 = pneg %p206
        $region54: #{retentive_attention.3} parent=51 // pred_check_branch
          %1287 = sbr.rel (%p1285) target = $region56
        $region55: #{retentive_attention.3} parent=51 // pred_region
          %s1288 = sand.u32 %s191, 1
          %s1289 = scalar_lea.sflag [#allocation3], %s1288
          %s1290 = sand.u32 %s191, 1
          %s1291 = smul.addr %s1290, 8
          %s1292 = scalar_lea.vmem [#allocation2], %s1291
          %1293 = dma.done %s1289, 128
        $region56: #{retentive_attention.3} parent=51 // pred_fallthru
          _
      $region52: #{retentive_attention.3} parent=5 // pred_fallthru
        _
    $region6: #{retentive_attention.3} parent=1 // loop_footer
      %s19 = sadd.s32 1, %s15
    $region7: #{retentive_attention.3} parent=1 // loop_footer_branch
      %14 = sbr.rel target = $region3
    $region8: #{retentive_attention.3} parent=1 // loop_exit
      _
    %1294 = vsyncpa [#allocation3], 1
    %s1295 = scalar_lea.sflag [#allocation3], 1
    %1296 = vsyncpa %s1295, 1

</llo_original>
